<compile_context>
chip_gen: v7x
topology: tpu7x:2x2x1
jax: 0.10.0
libtpu: 0.0.40
codegen_flags: <defaults>
</compile_context>

<pallas_src>
import functools
import math

import jax
import jax.numpy as jnp
from jax.experimental import pallas as pl
from jax.experimental.pallas import tpu as pltpu

# ------------------------- model config (tiny synthetic BERT) -------------------------
VOCAB = 100
VOCAB_PAD = 112                    # pad vocab rows to a bf16 sublane-tile multiple (16)
HIDDEN = 32
NUM_LAYERS = 2
NUM_HEADS = 2
HEAD_DIM = HIDDEN // NUM_HEADS
INTERMEDIATE = 64
MAX_POS = 16
BATCH = 2
SEQ = 8
LN_EPS = 1e-12
F32 = jnp.float32
BF16 = jnp.bfloat16

# ------------------- packed weight-slab layout (bf16, [W_ROWS, 128]) -------------------
LAYER_W_ROWS = HIDDEN + HIDDEN + HIDDEN + INTERMEDIATE   # wqkv(32) + wo(32) + w1(32) + w2(64)
W_LAYER0 = VOCAB_PAD
W_POOL = VOCAB_PAD + NUM_LAYERS * LAYER_W_ROWS
W_ROWS = W_POOL + HIDDEN                                  # 464 (multiple of 16)


# ---------------- packed small-param slab layout (f32, [P_ROWS, 128]) ----------------
def _pslab_layout(tokens):
    vec_r = tokens                 # emb_ln_g | emb_ln_b | pool_b | fc_w^T
    fcb_r = tokens + 1             # fc_b at col 0
    layer_r0 = tokens + 2          # 3 rows per layer: (bqkv|bo), (b1|b2), (ln1_g|ln1_b|ln2_g|ln2_b)
    blk_r0 = layer_r0 + 3 * NUM_LAYERS   # cross-batch block-diagonal attention bias [T, T]
    rows = ((blk_r0 + tokens + 7) // 8) * 8
    return vec_r, fcb_r, layer_r0, blk_r0, rows


# ------------------------------- fused forward kernel -------------------------------
def _fused_forward_kernel(ids_ref, mask_ref, w_ref, p_ref, out_ref, *, batch, seq):
    tokens = batch * seq
    vec_r, fcb_r, layer_r0, blk_r0, _ = _pslab_layout(tokens)
    scale = jnp.float32(1.0 / math.sqrt(HEAD_DIM))

    def mxu(a, b):
        return jnp.dot(a.astype(BF16), b.astype(BF16), preferred_element_type=jnp.float32)

    def layernorm(x, g, b):
        mu = jnp.mean(x, axis=-1, keepdims=True)
        xc = x - mu
        var = jnp.mean(xc * xc, axis=-1, keepdims=True)
        return xc * jax.lax.rsqrt(var + LN_EPS) * g + b

    def gelu(x):
        c = jnp.float32(0.7978845608028654)  # sqrt(2/pi)
        return 0.5 * x * (1.0 + jnp.tanh(c * (x + 0.044715 * x * x * x)))

    # ---- embeddings: one-hot gather on the MXU + pos/type emb + LayerNorm ----
    ids = ids_ref[...]                                                  # [T, 1] int32
    vocab_iota = jax.lax.broadcasted_iota(jnp.int32, (tokens, VOCAB_PAD), 1)
    onehot = (vocab_iota == ids).astype(BF16)                           # [T, V_pad]
    word_tbl = w_ref[0:VOCAB_PAD, 0:HIDDEN]                             # bf16, VMEM view
    h = jnp.dot(onehot, word_tbl, preferred_element_type=jnp.float32)   # [T, H] f32
    h = h + p_ref[0:tokens, 0:HIDDEN]                                   # + (pos + type) emb
    h = layernorm(h,
                  p_ref[vec_r:vec_r + 1, 0:HIDDEN],
                  p_ref[vec_r:vec_r + 1, HIDDEN:2 * HIDDEN])

    # ---- additive attention bias: key-padding mask + precomputed cross-batch block mask ----
    key_bias = (1.0 - mask_ref[...]) * jnp.float32(-1e9)                # [1, T]
    bias = key_bias + p_ref[blk_r0:blk_r0 + tokens, 0:tokens]           # [T, T]

    # per-head lane masks (heads occupy disjoint lane ranges of HIDDEN)
    lane_iota = jax.lax.broadcasted_iota(jnp.int32, (1, HIDDEN), 1)
    head_masks = [
        ((lane_iota >= hd * HEAD_DIM) & (lane_iota < (hd + 1) * HEAD_DIM)).astype(F32)
        for hd in range(NUM_HEADS)
    ]

    # ---- transformer layers (Python-unrolled, everything stays in vregs/VMEM) ----
    for l in range(NUM_LAYERS):
        wbase = W_LAYER0 + l * LAYER_W_ROWS
        prow = layer_r0 + 3 * l

        # fused QKV projection: one [T,H] x [H,3H] matmul
        qkv = mxu(h, w_ref[wbase:wbase + HIDDEN, 0:3 * HIDDEN]) \
            + p_ref[prow:prow + 1, 0:3 * HIDDEN]                        # [T, 3H] f32
        q = qkv[:, 0:HIDDEN]
        k = qkv[:, HIDDEN:2 * HIDDEN]
        v = qkv[:, 2 * HIDDEN:3 * HIDDEN]
        k_bf = k.astype(BF16)

        ctx = jnp.zeros((tokens, HIDDEN), F32)
        for hm in head_masks:
            # masking q zeroes out other heads' lanes -> contraction yields this head's q.k
            s = jax.lax.dot_general(
                (q * hm).astype(BF16), k_bf, (((1,), (1,)), ((), ())),
                preferred_element_type=jnp.float32) * scale + bias      # [T, T]
            s = s - jnp.max(s, axis=-1, keepdims=True)
            probs = jnp.exp(s)
            probs = probs / jnp.sum(probs, axis=-1, keepdims=True)      # exact softmax
            ctx = ctx + mxu(probs, v * hm)                              # only this head's lanes nonzero

        attn = mxu(ctx, w_ref[wbase + HIDDEN:wbase + 2 * HIDDEN, 0:HIDDEN]) \
             + p_ref[prow:prow + 1, 3 * HIDDEN:4 * HIDDEN]
        h1 = layernorm(h + attn,
                       p_ref[prow + 2:prow + 3, 0:HIDDEN],
                       p_ref[prow + 2:prow + 3, HIDDEN:2 * HIDDEN])

        ff = gelu(mxu(h1, w_ref[wbase + 2 * HIDDEN:wbase + 3 * HIDDEN, 0:INTERMEDIATE])
                  + p_ref[prow + 1:prow + 2, 0:INTERMEDIATE])
        ff = mxu(ff, w_ref[wbase + 3 * HIDDEN:wbase + 3 * HIDDEN + INTERMEDIATE, 0:HIDDEN]) \
           + p_ref[prow + 1:prow + 2, INTERMEDIATE:INTERMEDIATE + HIDDEN]
        h = layernorm(h1 + ff,
                      p_ref[prow + 2:prow + 3, 2 * HIDDEN:3 * HIDDEN],
                      p_ref[prow + 2:prow + 3, 3 * HIDDEN:4 * HIDDEN])

    # ---- pooler(tanh) + dropout(identity at eval) + fc ----
    # CLS rows are at static, sublane-aligned offsets b*seq -> free row slices.
    cls = jnp.concatenate([h[b * seq:b * seq + 1, :] for b in range(batch)], axis=0)   # [B, H]
    pooled = jnp.tanh(mxu(cls, w_ref[W_POOL:W_POOL + HIDDEN, 0:HIDDEN])
                      + p_ref[vec_r:vec_r + 1, 2 * HIDDEN:3 * HIDDEN])
    fc_wT = p_ref[vec_r:vec_r + 1, 3 * HIDDEN:4 * HIDDEN]                               # [1, H]
    fc_b = p_ref[fcb_r:fcb_r + 1, 0:1]                                                  # [1, 1]
    rating = jnp.sum(pooled * fc_wT, axis=-1, keepdims=True) + fc_b                     # [B, 1]
    out_ref[...] = rating.astype(out_ref.dtype)


# ------------------------------- parameter init -------------------------------
def init_params(key):
    std = 0.02

    def nrm(k, shape):
        return (std * jax.random.normal(k, shape)).astype(F32)

    keys = iter(jax.random.split(key, 64))
    p = {
        "word_emb": nrm(next(keys), (VOCAB, HIDDEN)),
        "pos_emb": nrm(next(keys), (MAX_POS, HIDDEN)),
        "type_emb": nrm(next(keys), (1, HIDDEN)),
        "emb_ln_g": jnp.ones((HIDDEN,), F32),
        "emb_ln_b": jnp.zeros((HIDDEN,), F32),
        "layers": [],
        "pool_w": nrm(next(keys), (HIDDEN, HIDDEN)),
        "pool_b": jnp.zeros((HIDDEN,), F32),
        "fc_w": nrm(next(keys), (HIDDEN, 1)),
        "fc_b": jnp.zeros((1,), F32),
    }
    for _ in range(NUM_LAYERS):
        layer = {
            "wq": nrm(next(keys), (HIDDEN, HIDDEN)), "bq": jnp.zeros((HIDDEN,), F32),
            "wk": nrm(next(keys), (HIDDEN, HIDDEN)), "bk": jnp.zeros((HIDDEN,), F32),
            "wv": nrm(next(keys), (HIDDEN, HIDDEN)), "bv": jnp.zeros((HIDDEN,), F32),
            "wo": nrm(next(keys), (HIDDEN, HIDDEN)), "bo": jnp.zeros((HIDDEN,), F32),
            "ln1_g": jnp.ones((HIDDEN,), F32), "ln1_b": jnp.zeros((HIDDEN,), F32),
            "w1": nrm(next(keys), (HIDDEN, INTERMEDIATE)), "b1": jnp.zeros((INTERMEDIATE,), F32),
            "w2": nrm(next(keys), (INTERMEDIATE, HIDDEN)), "b2": jnp.zeros((HIDDEN,), F32),
            "ln2_g": jnp.ones((HIDDEN,), F32), "ln2_b": jnp.zeros((HIDDEN,), F32),
        }
        p["layers"].append(layer)
    return p


# --------------------- one-time packing of all params into two slabs ---------------------
def pack_params(params, batch, seq):
    tokens = batch * seq
    vec_r, fcb_r, layer_r0, blk_r0, p_rows = _pslab_layout(tokens)
    H, I = HIDDEN, INTERMEDIATE

    # weight slab (bf16): all matmul weights, lane-padded to 128, sublane-tile aligned blocks
    w = jnp.zeros((W_ROWS, 128), F32)
    w = w.at[0:VOCAB, 0:H].set(params["word_emb"])
    for l, lp in enumerate(params["layers"]):
        base = W_LAYER0 + l * LAYER_W_ROWS
        wqkv = jnp.concatenate([lp["wq"], lp["wk"], lp["wv"]], axis=1)        # [H, 3H]
        w = w.at[base:base + H, 0:3 * H].set(wqkv)
        w = w.at[base + H:base + 2 * H, 0:H].set(lp["wo"])
        w = w.at[base + 2 * H:base + 3 * H, 0:I].set(lp["w1"])
        w = w.at[base + 3 * H:base + 3 * H + I, 0:H].set(lp["w2"])
    w = w.at[W_POOL:W_POOL + H, 0:H].set(params["pool_w"])
    wslab = w.astype(BF16)

    # small-param slab (f32): embeddings, LN params, biases, fc, block-diag attention bias
    p = jnp.zeros((p_rows, 128), F32)
    pos_type = jnp.tile(params["pos_emb"][:seq] + params["type_emb"][0:1], (batch, 1))  # [T, H]
    p = p.at[0:tokens, 0:H].set(pos_type)
    p = p.at[vec_r, 0:H].set(params["emb_ln_g"])
    p = p.at[vec_r, H:2 * H].set(params["emb_ln_b"])
    p = p.at[vec_r, 2 * H:3 * H].set(params["pool_b"])
    p = p.at[vec_r, 3 * H:4 * H].set(params["fc_w"][:, 0])
    p = p.at[fcb_r, 0].set(params["fc_b"][0])
    for l, lp in enumerate(params["layers"]):
        r = layer_r0 + 3 * l
        p = p.at[r, 0:3 * H].set(jnp.concatenate([lp["bq"], lp["bk"], lp["bv"]]))
        p = p.at[r, 3 * H:4 * H].set(lp["bo"])
        p = p.at[r + 1, 0:I].set(lp["b1"])
        p = p.at[r + 1, I:I + H].set(lp["b2"])
        p = p.at[r + 2, 0:H].set(lp["ln1_g"])
        p = p.at[r + 2, H:2 * H].set(lp["ln1_b"])
        p = p.at[r + 2, 2 * H:3 * H].set(lp["ln2_g"])
        p = p.at[r + 2, 3 * H:4 * H].set(lp["ln2_b"])
    same_batch = (jnp.arange(tokens)[:, None] // seq) == (jnp.arange(tokens)[None, :] // seq)
    block_bias = jnp.where(same_batch, 0.0, -1e9).astype(F32)                 # [T, T]
    p = p.at[blk_r0:blk_r0 + tokens, 0:tokens].set(block_bias)
    return wslab, p


# ------------------------- forward pass (single pallas_call) -------------------------
@jax.jit
def anime_rating_forward(wslab, pslab, input_ids, attention_mask):
    B, S = input_ids.shape
    T = B * S
    ids2d = input_ids.reshape(T, 1).astype(jnp.int32)                  # [T, 1]
    mask_row = attention_mask.reshape(1, T).astype(F32)                # [1, T]

    kernel = functools.partial(_fused_forward_kernel, batch=B, seq=S)
    return pl.pallas_call(
        kernel,
        out_shape=jax.ShapeDtypeStruct((B, 1), F32),
        in_specs=[pl.BlockSpec(memory_space=pltpu.MemorySpace.VMEM)] * 4,
        out_specs=pl.BlockSpec(memory_space=pltpu.MemorySpace.VMEM),
    )(ids2d, mask_row, wslab, pslab)


# ------------------------------------- main -------------------------------------
if __name__ == "__main__":
    key = jax.random.PRNGKey(0)
    k_param, k_ids = jax.random.split(key)

    params = init_params(k_param)
    wslab, pslab = pack_params(params, BATCH, SEQ)

    input_ids = jax.random.randint(k_ids, (BATCH, SEQ), 0, VOCAB, dtype=jnp.int32)
    attention_mask = jnp.array(
        [[1, 1, 1, 1, 1, 1, 1, 1],
         [1, 1, 1, 1, 1, 0, 0, 0]], dtype=jnp.int32
    )

    out = anime_rating_forward(wslab, pslab, input_ids, attention_mask)
    out = jax.block_until_ready(out)
    assert out.shape == (BATCH, 1)
    assert bool(jnp.all(jnp.isfinite(out)))
    print("KERNEL_OK")
</pallas_src>

<mosaic_0001>
module attributes {stable_mosaic.version = 11 : i64} {
  func.func @_fused_forward_kernel(%arg0: memref<16x1xi32, #tpu.memory_space<vmem>>, %arg1: memref<1x16xf32, #tpu.memory_space<vmem>>, %arg2: memref<464x128xbf16, #tpu.memory_space<vmem>>, %arg3: memref<40x128xf32, #tpu.memory_space<vmem>>, %arg4: memref<2x1xf32, #tpu.memory_space<vmem>>) attributes {dimension_semantics = [], scalar_prefetch = 0 : i64, scratch_operands = 0 : i64, tpu.core_type = #tpu.core_type<tc>} {
    %c0 = arith.constant 0 : index
    %c0_0 = arith.constant 0 : index
    %0 = vector.load %arg0[%c0, %c0_0] : memref<16x1xi32, #tpu.memory_space<vmem>>, vector<16x1xi32>
    %1 = tpu.iota {dimensions = array<i32: 1>} : vector<16x112xi32>
    %2 = vector.broadcast %0 : vector<16x1xi32> to vector<16x112xi32>
    %3 = arith.cmpi eq, %1, %2 : vector<16x112xi32>
    %4 = arith.extui %3 : vector<16x112xi1> to vector<16x112xi32>
    %5 = arith.sitofp %4 : vector<16x112xi32> to vector<16x112xf32>
    %6 = arith.truncf %5 : vector<16x112xf32> to vector<16x112xbf16>
    %c0_1 = arith.constant 0 : index
    %c0_2 = arith.constant 0 : index
    %7 = vector.load %arg2[%c0_1, %c0_2] : memref<464x128xbf16, #tpu.memory_space<vmem>>, vector<112x32xbf16>
    %cst = arith.constant dense<0.000000e+00> : vector<16x32xf32>
    %8 = tpu.matmul %6, %7, %cst {dimension_numbers = #tpu.dot_dimension_numbers<[1], [0], [0], [1], [0, 0, 1, 1], [], []>} : vector<16x112xbf16>, vector<112x32xbf16>, vector<16x32xf32> -> vector<16x32xf32>
    %c0_3 = arith.constant 0 : index
    %c0_4 = arith.constant 0 : index
    %9 = vector.load %arg3[%c0_3, %c0_4] : memref<40x128xf32, #tpu.memory_space<vmem>>, vector<16x32xf32>
    %10 = arith.addf %8, %9 : vector<16x32xf32>
    %c16 = arith.constant 16 : index
    %c0_5 = arith.constant 0 : index
    %11 = vector.load %arg3[%c16, %c0_5] : memref<40x128xf32, #tpu.memory_space<vmem>>, vector<1x32xf32>
    %c16_6 = arith.constant 16 : index
    %c32 = arith.constant 32 : index
    %12 = vector.load %arg3[%c16_6, %c32] : memref<40x128xf32, #tpu.memory_space<vmem>>, vector<1x32xf32>
    %cst_7 = arith.constant dense<0.000000e+00> : vector<16xf32>
    %13 = vector.multi_reduction <add>, %10, %cst_7 [1] : vector<16x32xf32> to vector<16xf32>
    %14 = vector.shape_cast %13 : vector<16xf32> to vector<16x1xf32>
    %cst_8 = arith.constant 3.200000e+01 : f32
    %15 = vector.broadcast %cst_8 : f32 to vector<16x1xf32>
    %16 = arith.divf %14, %15 : vector<16x1xf32>
    %17 = vector.broadcast %16 : vector<16x1xf32> to vector<16x32xf32>
    %18 = arith.subf %10, %17 : vector<16x32xf32>
    %19 = arith.mulf %18, %18 : vector<16x32xf32>
    %cst_9 = arith.constant dense<0.000000e+00> : vector<16xf32>
    %20 = vector.multi_reduction <add>, %19, %cst_9 [1] : vector<16x32xf32> to vector<16xf32>
    %21 = vector.shape_cast %20 : vector<16xf32> to vector<16x1xf32>
    %cst_10 = arith.constant 3.200000e+01 : f32
    %22 = vector.broadcast %cst_10 : f32 to vector<16x1xf32>
    %23 = arith.divf %21, %22 : vector<16x1xf32>
    %cst_11 = arith.constant 9.99999996E-13 : f32
    %24 = vector.broadcast %cst_11 : f32 to vector<16x1xf32>
    %25 = arith.addf %23, %24 : vector<16x1xf32>
    %26 = math.rsqrt %25 : vector<16x1xf32>
    %27 = vector.broadcast %26 : vector<16x1xf32> to vector<16x32xf32>
    %28 = arith.mulf %18, %27 : vector<16x32xf32>
    %29 = vector.broadcast %11 : vector<1x32xf32> to vector<16x32xf32>
    %30 = arith.mulf %28, %29 : vector<16x32xf32>
    %31 = vector.broadcast %12 : vector<1x32xf32> to vector<16x32xf32>
    %32 = arith.addf %30, %31 : vector<16x32xf32>
    %c0_12 = arith.constant 0 : index
    %c0_13 = arith.constant 0 : index
    %33 = vector.load %arg1[%c0_12, %c0_13] : memref<1x16xf32, #tpu.memory_space<vmem>>, vector<1x16xf32>
    %cst_14 = arith.constant 1.000000e+00 : f32
    %34 = vector.broadcast %cst_14 : f32 to vector<1x16xf32>
    %35 = arith.subf %34, %33 : vector<1x16xf32>
    %cst_15 = arith.constant -1.000000e+09 : f32
    %36 = vector.broadcast %cst_15 : f32 to vector<1x16xf32>
    %37 = arith.mulf %35, %36 : vector<1x16xf32>
    %c24 = arith.constant 24 : index
    %c0_16 = arith.constant 0 : index
    %38 = vector.load %arg3[%c24, %c0_16] : memref<40x128xf32, #tpu.memory_space<vmem>>, vector<16x16xf32>
    %39 = vector.broadcast %37 : vector<1x16xf32> to vector<16x16xf32>
    %40 = arith.addf %39, %38 : vector<16x16xf32>
    %41 = tpu.iota {dimensions = array<i32: 1>} : vector<1x32xi32>
    %c0_i32 = arith.constant 0 : i32
    %42 = vector.broadcast %c0_i32 : i32 to vector<1x32xi32>
    %43 = arith.cmpi sge, %41, %42 : vector<1x32xi32>
    %c16_i32 = arith.constant 16 : i32
    %44 = vector.broadcast %c16_i32 : i32 to vector<1x32xi32>
    %45 = arith.cmpi slt, %41, %44 : vector<1x32xi32>
    %46 = arith.andi %43, %45 : vector<1x32xi1>
    %47 = arith.extui %46 : vector<1x32xi1> to vector<1x32xi32>
    %48 = arith.sitofp %47 : vector<1x32xi32> to vector<1x32xf32>
    %c16_i32_17 = arith.constant 16 : i32
    %49 = vector.broadcast %c16_i32_17 : i32 to vector<1x32xi32>
    %50 = arith.cmpi sge, %41, %49 : vector<1x32xi32>
    %c32_i32 = arith.constant 32 : i32
    %51 = vector.broadcast %c32_i32 : i32 to vector<1x32xi32>
    %52 = arith.cmpi slt, %41, %51 : vector<1x32xi32>
    %53 = arith.andi %50, %52 : vector<1x32xi1>
    %54 = arith.extui %53 : vector<1x32xi1> to vector<1x32xi32>
    %55 = arith.sitofp %54 : vector<1x32xi32> to vector<1x32xf32>
    %c112 = arith.constant 112 : index
    %c0_18 = arith.constant 0 : index
    %56 = vector.load %arg2[%c112, %c0_18] : memref<464x128xbf16, #tpu.memory_space<vmem>>, vector<32x96xbf16>
    %57 = arith.truncf %32 : vector<16x32xf32> to vector<16x32xbf16>
    %cst_19 = arith.constant dense<0.000000e+00> : vector<16x96xf32>
    %58 = tpu.matmul %57, %56, %cst_19 {dimension_numbers = #tpu.dot_dimension_numbers<[1], [0], [0], [1], [0, 0, 1, 1], [], []>} : vector<16x32xbf16>, vector<32x96xbf16>, vector<16x96xf32> -> vector<16x96xf32>
    %c18 = arith.constant 18 : index
    %c0_20 = arith.constant 0 : index
    %59 = vector.load %arg3[%c18, %c0_20] : memref<40x128xf32, #tpu.memory_space<vmem>>, vector<1x96xf32>
    %60 = vector.broadcast %59 : vector<1x96xf32> to vector<16x96xf32>
    %61 = arith.addf %58, %60 : vector<16x96xf32>
    %62 = vector.extract_strided_slice %61 {offsets = [0, 0], sizes = [16, 32], strides = [1, 1]} : vector<16x96xf32> to vector<16x32xf32>
    %63 = vector.extract_strided_slice %61 {offsets = [0, 32], sizes = [16, 32], strides = [1, 1]} : vector<16x96xf32> to vector<16x32xf32>
    %64 = vector.extract_strided_slice %61 {offsets = [0, 64], sizes = [16, 32], strides = [1, 1]} : vector<16x96xf32> to vector<16x32xf32>
    %65 = arith.truncf %63 : vector<16x32xf32> to vector<16x32xbf16>
    %cst_21 = arith.constant 0.000000e+00 : f32
    %66 = vector.broadcast %cst_21 : f32 to vector<16x32xf32>
    %67 = vector.broadcast %48 : vector<1x32xf32> to vector<16x32xf32>
    %68 = arith.mulf %62, %67 : vector<16x32xf32>
    %69 = arith.truncf %68 : vector<16x32xf32> to vector<16x32xbf16>
    %cst_22 = arith.constant dense<0.000000e+00> : vector<16x16xf32>
    %70 = tpu.matmul %69, %65, %cst_22 {dimension_numbers = #tpu.dot_dimension_numbers<[1], [1], [0], [0], [0, 0, 1, 0], [], []>} : vector<16x32xbf16>, vector<16x32xbf16>, vector<16x16xf32> -> vector<16x16xf32>
    %cst_23 = arith.constant 2.500000e-01 : f32
    %71 = vector.broadcast %cst_23 : f32 to vector<16x16xf32>
    %72 = arith.mulf %70, %71 : vector<16x16xf32>
    %73 = arith.addf %72, %40 : vector<16x16xf32>
    %cst_24 = arith.constant dense<0xFF800000> : vector<16xf32>
    %74 = vector.multi_reduction <maximumf>, %73, %cst_24 [1] : vector<16x16xf32> to vector<16xf32>
    %75 = vector.shape_cast %74 : vector<16xf32> to vector<16x1xf32>
    %76 = vector.broadcast %75 : vector<16x1xf32> to vector<16x16xf32>
    %77 = arith.subf %73, %76 : vector<16x16xf32>
    %78 = math.exp %77 : vector<16x16xf32>
    %cst_25 = arith.constant dense<0.000000e+00> : vector<16xf32>
    %79 = vector.multi_reduction <add>, %78, %cst_25 [1] : vector<16x16xf32> to vector<16xf32>
    %80 = vector.shape_cast %79 : vector<16xf32> to vector<16x1xf32>
    %81 = vector.broadcast %80 : vector<16x1xf32> to vector<16x16xf32>
    %82 = arith.divf %78, %81 : vector<16x16xf32>
    %83 = vector.broadcast %48 : vector<1x32xf32> to vector<16x32xf32>
    %84 = arith.mulf %64, %83 : vector<16x32xf32>
    %85 = arith.truncf %82 : vector<16x16xf32> to vector<16x16xbf16>
    %86 = arith.truncf %84 : vector<16x32xf32> to vector<16x32xbf16>
    %cst_26 = arith.constant dense<0.000000e+00> : vector<16x32xf32>
    %87 = tpu.matmul %85, %86, %cst_26 {dimension_numbers = #tpu.dot_dimension_numbers<[1], [0], [0], [1], [0, 0, 1, 1], [], []>} : vector<16x16xbf16>, vector<16x32xbf16>, vector<16x32xf32> -> vector<16x32xf32>
    %88 = arith.addf %66, %87 : vector<16x32xf32>
    %89 = vector.broadcast %55 : vector<1x32xf32> to vector<16x32xf32>
    %90 = arith.mulf %62, %89 : vector<16x32xf32>
    %91 = arith.truncf %90 : vector<16x32xf32> to vector<16x32xbf16>
    %cst_27 = arith.constant dense<0.000000e+00> : vector<16x16xf32>
    %92 = tpu.matmul %91, %65, %cst_27 {dimension_numbers = #tpu.dot_dimension_numbers<[1], [1], [0], [0], [0, 0, 1, 0], [], []>} : vector<16x32xbf16>, vector<16x32xbf16>, vector<16x16xf32> -> vector<16x16xf32>
    %cst_28 = arith.constant 2.500000e-01 : f32
    %93 = vector.broadcast %cst_28 : f32 to vector<16x16xf32>
    %94 = arith.mulf %92, %93 : vector<16x16xf32>
    %95 = arith.addf %94, %40 : vector<16x16xf32>
    %cst_29 = arith.constant dense<0xFF800000> : vector<16xf32>
    %96 = vector.multi_reduction <maximumf>, %95, %cst_29 [1] : vector<16x16xf32> to vector<16xf32>
    %97 = vector.shape_cast %96 : vector<16xf32> to vector<16x1xf32>
    %98 = vector.broadcast %97 : vector<16x1xf32> to vector<16x16xf32>
    %99 = arith.subf %95, %98 : vector<16x16xf32>
    %100 = math.exp %99 : vector<16x16xf32>
    %cst_30 = arith.constant dense<0.000000e+00> : vector<16xf32>
    %101 = vector.multi_reduction <add>, %100, %cst_30 [1] : vector<16x16xf32> to vector<16xf32>
    %102 = vector.shape_cast %101 : vector<16xf32> to vector<16x1xf32>
    %103 = vector.broadcast %102 : vector<16x1xf32> to vector<16x16xf32>
    %104 = arith.divf %100, %103 : vector<16x16xf32>
    %105 = vector.broadcast %55 : vector<1x32xf32> to vector<16x32xf32>
    %106 = arith.mulf %64, %105 : vector<16x32xf32>
    %107 = arith.truncf %104 : vector<16x16xf32> to vector<16x16xbf16>
    %108 = arith.truncf %106 : vector<16x32xf32> to vector<16x32xbf16>
    %cst_31 = arith.constant dense<0.000000e+00> : vector<16x32xf32>
    %109 = tpu.matmul %107, %108, %cst_31 {dimension_numbers = #tpu.dot_dimension_numbers<[1], [0], [0], [1], [0, 0, 1, 1], [], []>} : vector<16x16xbf16>, vector<16x32xbf16>, vector<16x32xf32> -> vector<16x32xf32>
    %110 = arith.addf %88, %109 : vector<16x32xf32>
    %c144 = arith.constant 144 : index
    %c0_32 = arith.constant 0 : index
    %111 = vector.load %arg2[%c144, %c0_32] : memref<464x128xbf16, #tpu.memory_space<vmem>>, vector<32x32xbf16>
    %112 = arith.truncf %110 : vector<16x32xf32> to vector<16x32xbf16>
    %cst_33 = arith.constant dense<0.000000e+00> : vector<16x32xf32>
    %113 = tpu.matmul %112, %111, %cst_33 {dimension_numbers = #tpu.dot_dimension_numbers<[1], [0], [0], [1], [0, 0, 1, 1], [], []>} : vector<16x32xbf16>, vector<32x32xbf16>, vector<16x32xf32> -> vector<16x32xf32>
    %c18_34 = arith.constant 18 : index
    %c96 = arith.constant 96 : index
    %114 = vector.load %arg3[%c18_34, %c96] : memref<40x128xf32, #tpu.memory_space<vmem>>, vector<1x32xf32>
    %115 = vector.broadcast %114 : vector<1x32xf32> to vector<16x32xf32>
    %116 = arith.addf %113, %115 : vector<16x32xf32>
    %117 = arith.addf %32, %116 : vector<16x32xf32>
    %c20 = arith.constant 20 : index
    %c0_35 = arith.constant 0 : index
    %118 = vector.load %arg3[%c20, %c0_35] : memref<40x128xf32, #tpu.memory_space<vmem>>, vector<1x32xf32>
    %c20_36 = arith.constant 20 : index
    %c32_37 = arith.constant 32 : index
    %119 = vector.load %arg3[%c20_36, %c32_37] : memref<40x128xf32, #tpu.memory_space<vmem>>, vector<1x32xf32>
    %cst_38 = arith.constant dense<0.000000e+00> : vector<16xf32>
    %120 = vector.multi_reduction <add>, %117, %cst_38 [1] : vector<16x32xf32> to vector<16xf32>
    %121 = vector.shape_cast %120 : vector<16xf32> to vector<16x1xf32>
    %cst_39 = arith.constant 3.200000e+01 : f32
    %122 = vector.broadcast %cst_39 : f32 to vector<16x1xf32>
    %123 = arith.divf %121, %122 : vector<16x1xf32>
    %124 = vector.broadcast %123 : vector<16x1xf32> to vector<16x32xf32>
    %125 = arith.subf %117, %124 : vector<16x32xf32>
    %126 = arith.mulf %125, %125 : vector<16x32xf32>
    %cst_40 = arith.constant dense<0.000000e+00> : vector<16xf32>
    %127 = vector.multi_reduction <add>, %126, %cst_40 [1] : vector<16x32xf32> to vector<16xf32>
    %128 = vector.shape_cast %127 : vector<16xf32> to vector<16x1xf32>
    %cst_41 = arith.constant 3.200000e+01 : f32
    %129 = vector.broadcast %cst_41 : f32 to vector<16x1xf32>
    %130 = arith.divf %128, %129 : vector<16x1xf32>
    %cst_42 = arith.constant 9.99999996E-13 : f32
    %131 = vector.broadcast %cst_42 : f32 to vector<16x1xf32>
    %132 = arith.addf %130, %131 : vector<16x1xf32>
    %133 = math.rsqrt %132 : vector<16x1xf32>
    %134 = vector.broadcast %133 : vector<16x1xf32> to vector<16x32xf32>
    %135 = arith.mulf %125, %134 : vector<16x32xf32>
    %136 = vector.broadcast %118 : vector<1x32xf32> to vector<16x32xf32>
    %137 = arith.mulf %135, %136 : vector<16x32xf32>
    %138 = vector.broadcast %119 : vector<1x32xf32> to vector<16x32xf32>
    %139 = arith.addf %137, %138 : vector<16x32xf32>
    %c176 = arith.constant 176 : index
    %c0_43 = arith.constant 0 : index
    %140 = vector.load %arg2[%c176, %c0_43] : memref<464x128xbf16, #tpu.memory_space<vmem>>, vector<32x64xbf16>
    %141 = arith.truncf %139 : vector<16x32xf32> to vector<16x32xbf16>
    %cst_44 = arith.constant dense<0.000000e+00> : vector<16x64xf32>
    %142 = tpu.matmul %141, %140, %cst_44 {dimension_numbers = #tpu.dot_dimension_numbers<[1], [0], [0], [1], [0, 0, 1, 1], [], []>} : vector<16x32xbf16>, vector<32x64xbf16>, vector<16x64xf32> -> vector<16x64xf32>
    %c19 = arith.constant 19 : index
    %c0_45 = arith.constant 0 : index
    %143 = vector.load %arg3[%c19, %c0_45] : memref<40x128xf32, #tpu.memory_space<vmem>>, vector<1x64xf32>
    %144 = vector.broadcast %143 : vector<1x64xf32> to vector<16x64xf32>
    %145 = arith.addf %142, %144 : vector<16x64xf32>
    %cst_46 = arith.constant 5.000000e-01 : f32
    %146 = vector.broadcast %cst_46 : f32 to vector<16x64xf32>
    %147 = arith.mulf %146, %145 : vector<16x64xf32>
    %cst_47 = arith.constant 4.471500e-02 : f32
    %148 = vector.broadcast %cst_47 : f32 to vector<16x64xf32>
    %149 = arith.mulf %148, %145 : vector<16x64xf32>
    %150 = arith.mulf %149, %145 : vector<16x64xf32>
    %151 = arith.mulf %150, %145 : vector<16x64xf32>
    %152 = arith.addf %145, %151 : vector<16x64xf32>
    %cst_48 = arith.constant 0.797884583 : f32
    %153 = vector.broadcast %cst_48 : f32 to vector<16x64xf32>
    %154 = arith.mulf %153, %152 : vector<16x64xf32>
    %155 = math.tanh %154 : vector<16x64xf32>
    %cst_49 = arith.constant 1.000000e+00 : f32
    %156 = vector.broadcast %cst_49 : f32 to vector<16x64xf32>
    %157 = arith.addf %156, %155 : vector<16x64xf32>
    %158 = arith.mulf %147, %157 : vector<16x64xf32>
    %c208 = arith.constant 208 : index
    %c0_50 = arith.constant 0 : index
    %159 = vector.load %arg2[%c208, %c0_50] : memref<464x128xbf16, #tpu.memory_space<vmem>>, vector<64x32xbf16>
    %160 = arith.truncf %158 : vector<16x64xf32> to vector<16x64xbf16>
    %cst_51 = arith.constant dense<0.000000e+00> : vector<16x32xf32>
    %161 = tpu.matmul %160, %159, %cst_51 {dimension_numbers = #tpu.dot_dimension_numbers<[1], [0], [0], [1], [0, 0, 1, 1], [], []>} : vector<16x64xbf16>, vector<64x32xbf16>, vector<16x32xf32> -> vector<16x32xf32>
    %c19_52 = arith.constant 19 : index
    %c64 = arith.constant 64 : index
    %162 = vector.load %arg3[%c19_52, %c64] : memref<40x128xf32, #tpu.memory_space<vmem>>, vector<1x32xf32>
    %163 = vector.broadcast %162 : vector<1x32xf32> to vector<16x32xf32>
    %164 = arith.addf %161, %163 : vector<16x32xf32>
    %165 = arith.addf %139, %164 : vector<16x32xf32>
    %c20_53 = arith.constant 20 : index
    %c64_54 = arith.constant 64 : index
    %166 = vector.load %arg3[%c20_53, %c64_54] : memref<40x128xf32, #tpu.memory_space<vmem>>, vector<1x32xf32>
    %c20_55 = arith.constant 20 : index
    %c96_56 = arith.constant 96 : index
    %167 = vector.load %arg3[%c20_55, %c96_56] : memref<40x128xf32, #tpu.memory_space<vmem>>, vector<1x32xf32>
    %cst_57 = arith.constant dense<0.000000e+00> : vector<16xf32>
    %168 = vector.multi_reduction <add>, %165, %cst_57 [1] : vector<16x32xf32> to vector<16xf32>
    %169 = vector.shape_cast %168 : vector<16xf32> to vector<16x1xf32>
    %cst_58 = arith.constant 3.200000e+01 : f32
    %170 = vector.broadcast %cst_58 : f32 to vector<16x1xf32>
    %171 = arith.divf %169, %170 : vector<16x1xf32>
    %172 = vector.broadcast %171 : vector<16x1xf32> to vector<16x32xf32>
    %173 = arith.subf %165, %172 : vector<16x32xf32>
    %174 = arith.mulf %173, %173 : vector<16x32xf32>
    %cst_59 = arith.constant dense<0.000000e+00> : vector<16xf32>
    %175 = vector.multi_reduction <add>, %174, %cst_59 [1] : vector<16x32xf32> to vector<16xf32>
    %176 = vector.shape_cast %175 : vector<16xf32> to vector<16x1xf32>
    %cst_60 = arith.constant 3.200000e+01 : f32
    %177 = vector.broadcast %cst_60 : f32 to vector<16x1xf32>
    %178 = arith.divf %176, %177 : vector<16x1xf32>
    %cst_61 = arith.constant 9.99999996E-13 : f32
    %179 = vector.broadcast %cst_61 : f32 to vector<16x1xf32>
    %180 = arith.addf %178, %179 : vector<16x1xf32>
    %181 = math.rsqrt %180 : vector<16x1xf32>
    %182 = vector.broadcast %181 : vector<16x1xf32> to vector<16x32xf32>
    %183 = arith.mulf %173, %182 : vector<16x32xf32>
    %184 = vector.broadcast %166 : vector<1x32xf32> to vector<16x32xf32>
    %185 = arith.mulf %183, %184 : vector<16x32xf32>
    %186 = vector.broadcast %167 : vector<1x32xf32> to vector<16x32xf32>
    %187 = arith.addf %185, %186 : vector<16x32xf32>
    %c272 = arith.constant 272 : index
    %c0_62 = arith.constant 0 : index
    %188 = vector.load %arg2[%c272, %c0_62] : memref<464x128xbf16, #tpu.memory_space<vmem>>, vector<32x96xbf16>
    %189 = arith.truncf %187 : vector<16x32xf32> to vector<16x32xbf16>
    %cst_63 = arith.constant dense<0.000000e+00> : vector<16x96xf32>
    %190 = tpu.matmul %189, %188, %cst_63 {dimension_numbers = #tpu.dot_dimension_numbers<[1], [0], [0], [1], [0, 0, 1, 1], [], []>} : vector<16x32xbf16>, vector<32x96xbf16>, vector<16x96xf32> -> vector<16x96xf32>
    %c21 = arith.constant 21 : index
    %c0_64 = arith.constant 0 : index
    %191 = vector.load %arg3[%c21, %c0_64] : memref<40x128xf32, #tpu.memory_space<vmem>>, vector<1x96xf32>
    %192 = vector.broadcast %191 : vector<1x96xf32> to vector<16x96xf32>
    %193 = arith.addf %190, %192 : vector<16x96xf32>
    %194 = vector.extract_strided_slice %193 {offsets = [0, 0], sizes = [16, 32], strides = [1, 1]} : vector<16x96xf32> to vector<16x32xf32>
    %195 = vector.extract_strided_slice %193 {offsets = [0, 32], sizes = [16, 32], strides = [1, 1]} : vector<16x96xf32> to vector<16x32xf32>
    %196 = vector.extract_strided_slice %193 {offsets = [0, 64], sizes = [16, 32], strides = [1, 1]} : vector<16x96xf32> to vector<16x32xf32>
    %197 = arith.truncf %195 : vector<16x32xf32> to vector<16x32xbf16>
    %cst_65 = arith.constant 0.000000e+00 : f32
    %198 = vector.broadcast %cst_65 : f32 to vector<16x32xf32>
    %199 = vector.broadcast %48 : vector<1x32xf32> to vector<16x32xf32>
    %200 = arith.mulf %194, %199 : vector<16x32xf32>
    %201 = arith.truncf %200 : vector<16x32xf32> to vector<16x32xbf16>
    %cst_66 = arith.constant dense<0.000000e+00> : vector<16x16xf32>
    %202 = tpu.matmul %201, %197, %cst_66 {dimension_numbers = #tpu.dot_dimension_numbers<[1], [1], [0], [0], [0, 0, 1, 0], [], []>} : vector<16x32xbf16>, vector<16x32xbf16>, vector<16x16xf32> -> vector<16x16xf32>
    %cst_67 = arith.constant 2.500000e-01 : f32
    %203 = vector.broadcast %cst_67 : f32 to vector<16x16xf32>
    %204 = arith.mulf %202, %203 : vector<16x16xf32>
    %205 = arith.addf %204, %40 : vector<16x16xf32>
    %cst_68 = arith.constant dense<0xFF800000> : vector<16xf32>
    %206 = vector.multi_reduction <maximumf>, %205, %cst_68 [1] : vector<16x16xf32> to vector<16xf32>
    %207 = vector.shape_cast %206 : vector<16xf32> to vector<16x1xf32>
    %208 = vector.broadcast %207 : vector<16x1xf32> to vector<16x16xf32>
    %209 = arith.subf %205, %208 : vector<16x16xf32>
    %210 = math.exp %209 : vector<16x16xf32>
    %cst_69 = arith.constant dense<0.000000e+00> : vector<16xf32>
    %211 = vector.multi_reduction <add>, %210, %cst_69 [1] : vector<16x16xf32> to vector<16xf32>
    %212 = vector.shape_cast %211 : vector<16xf32> to vector<16x1xf32>
    %213 = vector.broadcast %212 : vector<16x1xf32> to vector<16x16xf32>
    %214 = arith.divf %210, %213 : vector<16x16xf32>
    %215 = vector.broadcast %48 : vector<1x32xf32> to vector<16x32xf32>
    %216 = arith.mulf %196, %215 : vector<16x32xf32>
    %217 = arith.truncf %214 : vector<16x16xf32> to vector<16x16xbf16>
    %218 = arith.truncf %216 : vector<16x32xf32> to vector<16x32xbf16>
    %cst_70 = arith.constant dense<0.000000e+00> : vector<16x32xf32>
    %219 = tpu.matmul %217, %218, %cst_70 {dimension_numbers = #tpu.dot_dimension_numbers<[1], [0], [0], [1], [0, 0, 1, 1], [], []>} : vector<16x16xbf16>, vector<16x32xbf16>, vector<16x32xf32> -> vector<16x32xf32>
    %220 = arith.addf %198, %219 : vector<16x32xf32>
    %221 = vector.broadcast %55 : vector<1x32xf32> to vector<16x32xf32>
    %222 = arith.mulf %194, %221 : vector<16x32xf32>
    %223 = arith.truncf %222 : vector<16x32xf32> to vector<16x32xbf16>
    %cst_71 = arith.constant dense<0.000000e+00> : vector<16x16xf32>
    %224 = tpu.matmul %223, %197, %cst_71 {dimension_numbers = #tpu.dot_dimension_numbers<[1], [1], [0], [0], [0, 0, 1, 0], [], []>} : vector<16x32xbf16>, vector<16x32xbf16>, vector<16x16xf32> -> vector<16x16xf32>
    %cst_72 = arith.constant 2.500000e-01 : f32
    %225 = vector.broadcast %cst_72 : f32 to vector<16x16xf32>
    %226 = arith.mulf %224, %225 : vector<16x16xf32>
    %227 = arith.addf %226, %40 : vector<16x16xf32>
    %cst_73 = arith.constant dense<0xFF800000> : vector<16xf32>
    %228 = vector.multi_reduction <maximumf>, %227, %cst_73 [1] : vector<16x16xf32> to vector<16xf32>
    %229 = vector.shape_cast %228 : vector<16xf32> to vector<16x1xf32>
    %230 = vector.broadcast %229 : vector<16x1xf32> to vector<16x16xf32>
    %231 = arith.subf %227, %230 : vector<16x16xf32>
    %232 = math.exp %231 : vector<16x16xf32>
    %cst_74 = arith.constant dense<0.000000e+00> : vector<16xf32>
    %233 = vector.multi_reduction <add>, %232, %cst_74 [1] : vector<16x16xf32> to vector<16xf32>
    %234 = vector.shape_cast %233 : vector<16xf32> to vector<16x1xf32>
    %235 = vector.broadcast %234 : vector<16x1xf32> to vector<16x16xf32>
    %236 = arith.divf %232, %235 : vector<16x16xf32>
    %237 = vector.broadcast %55 : vector<1x32xf32> to vector<16x32xf32>
    %238 = arith.mulf %196, %237 : vector<16x32xf32>
    %239 = arith.truncf %236 : vector<16x16xf32> to vector<16x16xbf16>
    %240 = arith.truncf %238 : vector<16x32xf32> to vector<16x32xbf16>
    %cst_75 = arith.constant dense<0.000000e+00> : vector<16x32xf32>
    %241 = tpu.matmul %239, %240, %cst_75 {dimension_numbers = #tpu.dot_dimension_numbers<[1], [0], [0], [1], [0, 0, 1, 1], [], []>} : vector<16x16xbf16>, vector<16x32xbf16>, vector<16x32xf32> -> vector<16x32xf32>
    %242 = arith.addf %220, %241 : vector<16x32xf32>
    %c304 = arith.constant 304 : index
    %c0_76 = arith.constant 0 : index
    %243 = vector.load %arg2[%c304, %c0_76] : memref<464x128xbf16, #tpu.memory_space<vmem>>, vector<32x32xbf16>
    %244 = arith.truncf %242 : vector<16x32xf32> to vector<16x32xbf16>
    %cst_77 = arith.constant dense<0.000000e+00> : vector<16x32xf32>
    %245 = tpu.matmul %244, %243, %cst_77 {dimension_numbers = #tpu.dot_dimension_numbers<[1], [0], [0], [1], [0, 0, 1, 1], [], []>} : vector<16x32xbf16>, vector<32x32xbf16>, vector<16x32xf32> -> vector<16x32xf32>
    %c21_78 = arith.constant 21 : index
    %c96_79 = arith.constant 96 : index
    %246 = vector.load %arg3[%c21_78, %c96_79] : memref<40x128xf32, #tpu.memory_space<vmem>>, vector<1x32xf32>
    %247 = vector.broadcast %246 : vector<1x32xf32> to vector<16x32xf32>
    %248 = arith.addf %245, %247 : vector<16x32xf32>
    %249 = arith.addf %187, %248 : vector<16x32xf32>
    %c23 = arith.constant 23 : index
    %c0_80 = arith.constant 0 : index
    %250 = vector.load %arg3[%c23, %c0_80] : memref<40x128xf32, #tpu.memory_space<vmem>>, vector<1x32xf32>
    %c23_81 = arith.constant 23 : index
    %c32_82 = arith.constant 32 : index
    %251 = vector.load %arg3[%c23_81, %c32_82] : memref<40x128xf32, #tpu.memory_space<vmem>>, vector<1x32xf32>
    %cst_83 = arith.constant dense<0.000000e+00> : vector<16xf32>
    %252 = vector.multi_reduction <add>, %249, %cst_83 [1] : vector<16x32xf32> to vector<16xf32>
    %253 = vector.shape_cast %252 : vector<16xf32> to vector<16x1xf32>
    %cst_84 = arith.constant 3.200000e+01 : f32
    %254 = vector.broadcast %cst_84 : f32 to vector<16x1xf32>
    %255 = arith.divf %253, %254 : vector<16x1xf32>
    %256 = vector.broadcast %255 : vector<16x1xf32> to vector<16x32xf32>
    %257 = arith.subf %249, %256 : vector<16x32xf32>
    %258 = arith.mulf %257, %257 : vector<16x32xf32>
    %cst_85 = arith.constant dense<0.000000e+00> : vector<16xf32>
    %259 = vector.multi_reduction <add>, %258, %cst_85 [1] : vector<16x32xf32> to vector<16xf32>
    %260 = vector.shape_cast %259 : vector<16xf32> to vector<16x1xf32>
    %cst_86 = arith.constant 3.200000e+01 : f32
    %261 = vector.broadcast %cst_86 : f32 to vector<16x1xf32>
    %262 = arith.divf %260, %261 : vector<16x1xf32>
    %cst_87 = arith.constant 9.99999996E-13 : f32
    %263 = vector.broadcast %cst_87 : f32 to vector<16x1xf32>
    %264 = arith.addf %262, %263 : vector<16x1xf32>
    %265 = math.rsqrt %264 : vector<16x1xf32>
    %266 = vector.broadcast %265 : vector<16x1xf32> to vector<16x32xf32>
    %267 = arith.mulf %257, %266 : vector<16x32xf32>
    %268 = vector.broadcast %250 : vector<1x32xf32> to vector<16x32xf32>
    %269 = arith.mulf %267, %268 : vector<16x32xf32>
    %270 = vector.broadcast %251 : vector<1x32xf32> to vector<16x32xf32>
    %271 = arith.addf %269, %270 : vector<16x32xf32>
    %c336 = arith.constant 336 : index
    %c0_88 = arith.constant 0 : index
    %272 = vector.load %arg2[%c336, %c0_88] : memref<464x128xbf16, #tpu.memory_space<vmem>>, vector<32x64xbf16>
    %273 = arith.truncf %271 : vector<16x32xf32> to vector<16x32xbf16>
    %cst_89 = arith.constant dense<0.000000e+00> : vector<16x64xf32>
    %274 = tpu.matmul %273, %272, %cst_89 {dimension_numbers = #tpu.dot_dimension_numbers<[1], [0], [0], [1], [0, 0, 1, 1], [], []>} : vector<16x32xbf16>, vector<32x64xbf16>, vector<16x64xf32> -> vector<16x64xf32>
    %c22 = arith.constant 22 : index
    %c0_90 = arith.constant 0 : index
    %275 = vector.load %arg3[%c22, %c0_90] : memref<40x128xf32, #tpu.memory_space<vmem>>, vector<1x64xf32>
    %276 = vector.broadcast %275 : vector<1x64xf32> to vector<16x64xf32>
    %277 = arith.addf %274, %276 : vector<16x64xf32>
    %cst_91 = arith.constant 5.000000e-01 : f32
    %278 = vector.broadcast %cst_91 : f32 to vector<16x64xf32>
    %279 = arith.mulf %278, %277 : vector<16x64xf32>
    %cst_92 = arith.constant 4.471500e-02 : f32
    %280 = vector.broadcast %cst_92 : f32 to vector<16x64xf32>
    %281 = arith.mulf %280, %277 : vector<16x64xf32>
    %282 = arith.mulf %281, %277 : vector<16x64xf32>
    %283 = arith.mulf %282, %277 : vector<16x64xf32>
    %284 = arith.addf %277, %283 : vector<16x64xf32>
    %cst_93 = arith.constant 0.797884583 : f32
    %285 = vector.broadcast %cst_93 : f32 to vector<16x64xf32>
    %286 = arith.mulf %285, %284 : vector<16x64xf32>
    %287 = math.tanh %286 : vector<16x64xf32>
    %cst_94 = arith.constant 1.000000e+00 : f32
    %288 = vector.broadcast %cst_94 : f32 to vector<16x64xf32>
    %289 = arith.addf %288, %287 : vector<16x64xf32>
    %290 = arith.mulf %279, %289 : vector<16x64xf32>
    %c368 = arith.constant 368 : index
    %c0_95 = arith.constant 0 : index
    %291 = vector.load %arg2[%c368, %c0_95] : memref<464x128xbf16, #tpu.memory_space<vmem>>, vector<64x32xbf16>
    %292 = arith.truncf %290 : vector<16x64xf32> to vector<16x64xbf16>
    %cst_96 = arith.constant dense<0.000000e+00> : vector<16x32xf32>
    %293 = tpu.matmul %292, %291, %cst_96 {dimension_numbers = #tpu.dot_dimension_numbers<[1], [0], [0], [1], [0, 0, 1, 1], [], []>} : vector<16x64xbf16>, vector<64x32xbf16>, vector<16x32xf32> -> vector<16x32xf32>
    %c22_97 = arith.constant 22 : index
    %c64_98 = arith.constant 64 : index
    %294 = vector.load %arg3[%c22_97, %c64_98] : memref<40x128xf32, #tpu.memory_space<vmem>>, vector<1x32xf32>
    %295 = vector.broadcast %294 : vector<1x32xf32> to vector<16x32xf32>
    %296 = arith.addf %293, %295 : vector<16x32xf32>
    %297 = arith.addf %271, %296 : vector<16x32xf32>
    %c23_99 = arith.constant 23 : index
    %c64_100 = arith.constant 64 : index
    %298 = vector.load %arg3[%c23_99, %c64_100] : memref<40x128xf32, #tpu.memory_space<vmem>>, vector<1x32xf32>
    %c23_101 = arith.constant 23 : index
    %c96_102 = arith.constant 96 : index
    %299 = vector.load %arg3[%c23_101, %c96_102] : memref<40x128xf32, #tpu.memory_space<vmem>>, vector<1x32xf32>
    %cst_103 = arith.constant dense<0.000000e+00> : vector<16xf32>
    %300 = vector.multi_reduction <add>, %297, %cst_103 [1] : vector<16x32xf32> to vector<16xf32>
    %301 = vector.shape_cast %300 : vector<16xf32> to vector<16x1xf32>
    %cst_104 = arith.constant 3.200000e+01 : f32
    %302 = vector.broadcast %cst_104 : f32 to vector<16x1xf32>
    %303 = arith.divf %301, %302 : vector<16x1xf32>
    %304 = vector.broadcast %303 : vector<16x1xf32> to vector<16x32xf32>
    %305 = arith.subf %297, %304 : vector<16x32xf32>
    %306 = arith.mulf %305, %305 : vector<16x32xf32>
    %cst_105 = arith.constant dense<0.000000e+00> : vector<16xf32>
    %307 = vector.multi_reduction <add>, %306, %cst_105 [1] : vector<16x32xf32> to vector<16xf32>
    %308 = vector.shape_cast %307 : vector<16xf32> to vector<16x1xf32>
    %cst_106 = arith.constant 3.200000e+01 : f32
    %309 = vector.broadcast %cst_106 : f32 to vector<16x1xf32>
    %310 = arith.divf %308, %309 : vector<16x1xf32>
    %cst_107 = arith.constant 9.99999996E-13 : f32
    %311 = vector.broadcast %cst_107 : f32 to vector<16x1xf32>
    %312 = arith.addf %310, %311 : vector<16x1xf32>
    %313 = math.rsqrt %312 : vector<16x1xf32>
    %314 = vector.broadcast %313 : vector<16x1xf32> to vector<16x32xf32>
    %315 = arith.mulf %305, %314 : vector<16x32xf32>
    %316 = vector.broadcast %298 : vector<1x32xf32> to vector<16x32xf32>
    %317 = arith.mulf %315, %316 : vector<16x32xf32>
    %318 = vector.broadcast %299 : vector<1x32xf32> to vector<16x32xf32>
    %319 = arith.addf %317, %318 : vector<16x32xf32>
    %320 = vector.extract_strided_slice %319 {offsets = [0, 0], sizes = [1, 32], strides = [1, 1]} : vector<16x32xf32> to vector<1x32xf32>
    %321 = vector.extract_strided_slice %319 {offsets = [8, 0], sizes = [1, 32], strides = [1, 1]} : vector<16x32xf32> to vector<1x32xf32>
    %322 = tpu.concatenate %320, %321 in 0 : vector<1x32xf32>, vector<1x32xf32> -> vector<2x32xf32>
    %c432 = arith.constant 432 : index
    %c0_108 = arith.constant 0 : index
    %323 = vector.load %arg2[%c432, %c0_108] : memref<464x128xbf16, #tpu.memory_space<vmem>>, vector<32x32xbf16>
    %324 = arith.truncf %322 : vector<2x32xf32> to vector<2x32xbf16>
    %cst_109 = arith.constant dense<0.000000e+00> : vector<2x32xf32>
    %325 = tpu.matmul %324, %323, %cst_109 {dimension_numbers = #tpu.dot_dimension_numbers<[1], [0], [0], [1], [0, 0, 1, 1], [], []>} : vector<2x32xbf16>, vector<32x32xbf16>, vector<2x32xf32> -> vector<2x32xf32>
    %c16_110 = arith.constant 16 : index
    %c64_111 = arith.constant 64 : index
    %326 = vector.load %arg3[%c16_110, %c64_111] : memref<40x128xf32, #tpu.memory_space<vmem>>, vector<1x32xf32>
    %327 = vector.broadcast %326 : vector<1x32xf32> to vector<2x32xf32>
    %328 = arith.addf %325, %327 : vector<2x32xf32>
    %329 = math.tanh %328 : vector<2x32xf32>
    %c16_112 = arith.constant 16 : index
    %c96_113 = arith.constant 96 : index
    %330 = vector.load %arg3[%c16_112, %c96_113] : memref<40x128xf32, #tpu.memory_space<vmem>>, vector<1x32xf32>
    %c17 = arith.constant 17 : index
    %c0_114 = arith.constant 0 : index
    %331 = vector.load %arg3[%c17, %c0_114] : memref<40x128xf32, #tpu.memory_space<vmem>>, vector<1x1xf32>
    %332 = vector.broadcast %330 : vector<1x32xf32> to vector<2x32xf32>
    %333 = arith.mulf %329, %332 : vector<2x32xf32>
    %cst_115 = arith.constant dense<0.000000e+00> : vector<2xf32>
    %334 = vector.multi_reduction <add>, %333, %cst_115 [1] : vector<2x32xf32> to vector<2xf32>
    %335 = vector.shape_cast %334 : vector<2xf32> to vector<2x1xf32>
    %336 = vector.broadcast %331 : vector<1x1xf32> to vector<2x1xf32>
    %337 = arith.addf %335, %336 : vector<2x1xf32>
    %c0_116 = arith.constant 0 : index
    %c0_117 = arith.constant 0 : index
    %338 = vector.load %arg4[%c0_116, %c0_117] : memref<2x1xf32, #tpu.memory_space<vmem>>, vector<2x1xf32>
    tpu.vector_store %arg4[%c0_116, %c0_117], %337 {strides = array<i32>} : memref<2x1xf32, #tpu.memory_space<vmem>>, vector<2x1xf32>,
    return
  }
}

</mosaic_0001>

<llo_original>
// kernel: anime_rating_forward.1
$region0: #{anime_rating_forward.1}
  #allocation0 [shape = 'u32[]', space=smem, size = 0x4, offset = 0x4, fixed_abs, tag = 'smem constant byte address 0x4 - core index']
  #allocation1 [shape = 'u32[144,128]{1,0:T(1,128)}', space=vmem, size = 0x12000, scoped, tag = 'internal scratch']
  %s0 = inlined_call_operand.vmem [shape: s32[16,1], index: 0, kind: input, shape index: {}]
  %s1 = inlined_call_operand.vmem [shape: f32[1,16], index: 1, kind: input, shape index: {}]
  %s2 = inlined_call_operand.hbm [shape: bf16[464,128], index: 2, kind: input, shape index: {}]
  %s3 = inlined_call_operand.hbm [shape: f32[40,128], index: 3, kind: input, shape index: {}]
  %s4 = inlined_call_operand.vmem [shape: f32[2,1], index: 4, kind: output, shape index: {}]
  %s5 = sld [smem:[#allocation0]]
  $region34: #{anime_rating_forward.1} parent=0
    _
  %s7 = ssub.s32 1, %s5
  %s8 = scalar_select 0, %s7, %s5
  $region1: #{anime_rating_forward.1} parent=0
    #allocation2 [shape = 'u8[118784]{0}', space=vmem, size = 0x1d000, scoped, tag = 'input window, operand 2, single buffered']
    #allocation3 [shape = 's32[1]{0}', space=sflag, size = 0x4, scoped, tag = 'scoped memory for anime_rating_forward.1']
    #allocation4 [shape = 'u8[20480]{0}', space=vmem, size = 0x5000, scoped, tag = 'input window, operand 3, single buffered']
    #allocation5 [shape = 's32[1]{0}', space=sflag, size = 0x4, scoped, tag = 'scoped memory for anime_rating_forward.1']
    %9 = vsyncpa [#allocation3], 0
    %10 = vsyncpa [#allocation5], 0
    // Predicated region
    $region2: #{anime_rating_forward.1} parent=1 // pred_check
      _
    $region3: #{anime_rating_forward.1} parent=1 // pred_check_branch
      %12 = sbr.rel (0) target = $region5
    $region4: #{anime_rating_forward.1} parent=1 // pred_region
      _
    $region5: #{anime_rating_forward.1} parent=1 // pred_fallthru
      _
    // Predicated region
    $region6: #{anime_rating_forward.1} parent=1 // pred_check
      _
    $region7: #{anime_rating_forward.1} parent=1 // pred_check_branch
      %14 = sbr.rel (0) target = $region9
    $region8: #{anime_rating_forward.1} parent=1 // pred_region
      _
    $region9: #{anime_rating_forward.1} parent=1 // pred_fallthru
      _
    // Predicated region
    $region10: #{anime_rating_forward.1} parent=1 // pred_check
      _
    $region11: #{anime_rating_forward.1} parent=1 // pred_check_branch
      %16 = sbr.rel (0) target = $region13
    $region12: #{anime_rating_forward.1} parent=1 // pred_region
      %s18 = ssub.s32 3712, 3712
      %19 = vsyncadd [#allocation3], %s18
      %s20 = sshll.u32 [#allocation2], 4
      %s21 = int_to_ptr.vmem [resolvable:$true] %s20
      %26 = dma.hbm_to_vmem [thread:$0]  %s2, 3712, %s21, [#allocation3], 64, 64, 4
    $region13: #{anime_rating_forward.1} parent=1 // pred_fallthru
      _
    // Predicated region
    $region14: #{anime_rating_forward.1} parent=1 // pred_check
      _
    $region15: #{anime_rating_forward.1} parent=1 // pred_check_branch
      %28 = sbr.rel (0) target = $region17
    $region16: #{anime_rating_forward.1} parent=1 // pred_region
      %s30 = ssub.s32 640, 640
      %31 = vsyncadd [#allocation5], %s30
      %s32 = sshll.u32 [#allocation4], 4
      %s33 = int_to_ptr.vmem [resolvable:$true] %s32
      %38 = dma.hbm_to_vmem [thread:$0]  %s3, 640, %s33, [#allocation5], 128, 128, 8
    $region17: #{anime_rating_forward.1} parent=1 // pred_fallthru
      _
    // Predicated region
    $region18: #{anime_rating_forward.1} parent=1 // pred_check
      _
    $region19: #{anime_rating_forward.1} parent=1 // pred_check_branch
      %40 = sbr.rel (0) target = $region21
    $region20: #{anime_rating_forward.1} parent=1 // pred_region
      %41 = dma.done [#allocation3], 3712
    $region21: #{anime_rating_forward.1} parent=1 // pred_fallthru
      _
    // Predicated region
    $region22: #{anime_rating_forward.1} parent=1 // pred_check
      _
    $region23: #{anime_rating_forward.1} parent=1 // pred_check_branch
      %43 = sbr.rel (0) target = $region25
    $region24: #{anime_rating_forward.1} parent=1 // pred_region
      %44 = dma.done [#allocation5], 640
    $region25: #{anime_rating_forward.1} parent=1 // pred_fallthru
      _
    %v46 = vld [vmem:[%s0] sm:$0xff]
    %v47 = vld [vmem:[%s0 + $0x8] sm:$0xff]
    %v48 = vlaneseq
    %v49 = vand.u32 %v48, 127
    %50 = vset.pattern.permute.xlu0 0
    %51 = vperm.xlu0 %50, %v46
    %v52 = vpop.permute.xlu0 %51
    %53 = vset.pattern.permute.xlu0 0
    %54 = vperm.xlu0 %53, %v47
    %v55 = vpop.permute.xlu0 %54
    %vm56 = vcmp.eq.s32.totalorder %v49, %v52
    %vm57 = vcmp.eq.s32.totalorder %v49, %v55
    %v58 = vsel %vm56, 1, 0
    %v59 = vsel %vm57, 1, 0
    %v60 = vcvt.s32.f32 %v58
    %v61 = vcvt.s32.f32 %v59
    %v62 = vpack.c.bf16 %v61, %v60
    %v63 = vld [vmem:[#allocation2] sm:$0xf]
    %v64 = vld [vmem:[#allocation2 + $0x4] sm:$0xf]
    %v65 = vld [vmem:[#allocation2 + $0x8] sm:$0xf]
    %v66 = vld [vmem:[#allocation2 + $0xc] sm:$0xf]
    %v67 = vld [vmem:[#allocation2 + $0x10] sm:$0xf]
    %v68 = vld [vmem:[#allocation2 + $0x14] sm:$0xf]
    %v69 = vld [vmem:[#allocation2 + $0x18] sm:$0xf]
    %v70 = vld [vmem:[#allocation2 + $0x1c] sm:$0xf]
    %v71 = vld [vmem:[#allocation2 + $0x20] sm:$0xf]
    %v72 = vld [vmem:[#allocation2 + $0x24] sm:$0xf]
    %v73 = vld [vmem:[#allocation2 + $0x28] sm:$0xf]
    %v74 = vld [vmem:[#allocation2 + $0x2c] sm:$0xf]
    %v75 = vld [vmem:[#allocation2 + $0x30] sm:$0xf]
    %v76 = vld [vmem:[#allocation2 + $0x34] sm:$0xf]
    %v77 = vld [vmem:[#allocation4] sm:$0xff]
    %v78 = vld [vmem:[#allocation4 + $0x8] sm:$0xff]
    %v93 = vunpack.c.l.b16 %v63
    %v94 = vunpack.c.l.b16 %v64
    %v95 = vunpack.c.l.b16 %v65
    %v96 = vunpack.c.l.b16 %v66
    %v97 = vunpack.c.l.b16 %v67
    %v98 = vunpack.c.l.b16 %v68
    %v99 = vunpack.c.l.b16 %v69
    %v100 = vunpack.c.l.b16 %v70
    %v101 = vunpack.c.l.b16 %v71
    %v102 = vunpack.c.l.b16 %v72
    %v103 = vunpack.c.l.b16 %v73
    %v104 = vunpack.c.l.b16 %v74
    %v105 = vunpack.c.l.b16 %v75
    %v106 = vunpack.c.l.b16 %v76
    %v107 = vpack.c.b16 %v94, %v93
    %v108 = vpack.c.b16 %v96, %v95
    %v109 = vpack.c.b16 %v98, %v97
    %v110 = vpack.c.b16 %v100, %v99
    %v111 = vpack.c.b16 %v102, %v101
    %v112 = vpack.c.b16 %v104, %v103
    %v113 = vpack.c.b16 %v106, %v105
    %vm121 = vcmask 916480
    %v123 = vsel %vm121, %v62, 0
    %125 = vmatprep.subr.bf16.mxu0 0
    %126 = vmatpush1.bf16.msra.mxu0 %v107
    %127 = vmatprep.subr.bf16.mxu0 0
    %128 = vmatpush1.bf16.msra.mxu0 %v108
    %129 = vmatprep.subr.bf16.mxu0 0
    %130 = vmatpush1.bf16.msra.mxu0 %v109
    %131 = vmatprep.subr.bf16.mxu0 0
    %132 = vmatpush1.bf16.msra.mxu0 %v110
    %133 = vmatprep.subr.bf16.mxu0 0
    %134 = vmatpush1.bf16.msra.mxu0 %v111
    %135 = vmatprep.subr.bf16.mxu0 0
    %136 = vmatpush1.bf16.msra.mxu0 %v112
    %137 = vmatprep.subr.bf16.mxu0 0
    %138 = vmatpush1.bf16.msra.mxu0 %v113
    %139 = vmatprep.subr.bf16.mxu0 0
    %140 = vmatpush1.bf16.msra.mxu0 0
    %141 = vmatprep.subr.bf16.mxu0 0
    %142 = vmatpush1.bf16.msra.mxu0 0
    %143 = vmatprep.subr.bf16.mxu0 0
    %144 = vmatpush1.bf16.msra.mxu0 0
    %145 = vmatprep.subr.bf16.mxu0 0
    %146 = vmatpush1.bf16.msra.mxu0 0
    %147 = vmatprep.subr.bf16.mxu0 0
    %148 = vmatpush1.bf16.msra.mxu0 0
    %149 = vmatprep.subr.bf16.mxu0 0
    %150 = vmatpush1.bf16.msra.mxu0 0
    %151 = vmatprep.subr.bf16.mxu0 0
    %152 = vmatpush1.bf16.msra.mxu0 0
    %153 = vmatprep.subr.bf16.mxu0 0
    %154 = vmatpush1.bf16.msra.mxu0 0
    %155 = vmatprep.subr.bf16.mxu0 0
    %156 = vmatpush1.bf16.msra.mxu0 0
    %157 = vmatprep.mubr.bf16.mxu0 0
    %158 = vmatmul.mubr.bf16.gmra.mrb[0].mxu0 %v123
    %v159 = vpop.f32.mrb[0].mxu0
    %v160 = vadd.f32 %v77, %v159
    %v161 = vpop.f32.mrb[0].mxu0
    %v162 = vpop.f32.mrb[0].mxu0
    %v163 = vadd.f32 %v78, %v162
    %v164 = vpop.f32.mrb[0].mxu0
    %165 = vdwg.mxu0
    %v166 = vld [vmem:[#allocation4 + $0x10] sm:$0x1]
    %vm167 = vcmask 261120
    %v168 = vsel %vm167, %v160, 0.0
    %169 = vadd.xlane.f32.xlu0 %v168
    %v170 = vpop.xlane.xlu0 %169
    %v171 = vsel %vm167, %v163, 0.0
    %172 = vadd.xlane.f32.xlu0 %v171
    %v173 = vpop.xlane.xlu0 %172
    %v174 = vrcp.pop 32.0
    %v175 = vmul.f32 %v170, %v174
    %v176 = vmul.f32 %v173, %v174
    %v177 = vsub.f32 %v160, %v175
    %v178 = vsub.f32 %v163, %v176
    %v179 = vmul.f32 %v177, %v177
    %v180 = vmul.f32 %v178, %v178
    %v181 = vsel %vm167, %v179, 0.0
    %182 = vadd.xlane.f32.xlu0 %v181
    %v183 = vpop.xlane.xlu0 %182
    %v184 = vsel %vm167, %v180, 0.0
    %185 = vadd.xlane.f32.xlu0 %v184
    %v186 = vpop.xlane.xlu0 %185
    %v187 = vmul.f32 %v183, %v174
    %v188 = vmul.f32 %v186, %v174
    %v189 = vadd.f32 %v187, 1e-12
    %v190 = vadd.f32 %v188, 1e-12
    %v191 = vrsqrt.pop %v189
    %v192 = vrsqrt.pop %v190
    %v193 = vmul.f32 %v177, %v191
    %v194 = vmul.f32 %v178, %v192
    %v195 = vlaneseq
    %v196 = vshrl.u32 %v195, 7
    %v197 = vsub.s32 0, %v196
    %v198 = vrot.slane %v166, %v197
    %v199 = vmul.f32 %v193, %v198
    %v200 = vmul.f32 %v194, %v198
    %202 = vrot.lane.b32.xlu0 %v198, 96
    %v203 = vpop.permute.xlu0 %202
    %v205 = vadd.f32 %v199, %v203
    %v206 = vadd.f32 %v200, %v203
    %v207 = vld [vmem:[%s1] sm:$0x1]
    %v208 = vsub.f32 1.0, %v207
    %v209 = vmul.f32 %v208, -1e+09
    %v210 = vld [vmem:[#allocation4 + $0x18] sm:$0xff]
    %v211 = vld [vmem:[#allocation4 + $0x20] sm:$0xff]
    %v213 = vlaneseq
    %v214 = vshrl.u32 %v213, 7
    %v215 = vsub.s32 0, %v214
    %v216 = vrot.slane %v209, %v215
    %v218 = vadd.f32 %v216, %v210
    %v219 = vadd.f32 %v216, %v211
    %vm220 = vcmp.ge.s32.totalorder %v49, 0
    %vm221 = vcmp.lt.s32.totalorder %v49, 16
    %vm222 = vmand %vm220, %vm221
    %v223 = vsel %vm222, 1, 0
    %v224 = vcvt.s32.f32 %v223
    %vm225 = vcmp.ge.s32.totalorder %v49, 16
    %vm226 = vcmp.lt.s32.totalorder %v49, 32
    %vm227 = vmand %vm225, %vm226
    %v228 = vsel %vm227, 1, 0
    %v229 = vcvt.s32.f32 %v228
    %v230 = vld [vmem:[#allocation2 + $0x38] sm:$0xf]
    %v231 = vld [vmem:[#allocation2 + $0x3c] sm:$0xf]
    %v232 = vld [vmem:[#allocation2 + $0x40] sm:$0xf]
    %v233 = vld [vmem:[#allocation2 + $0x44] sm:$0xf]
    %v234 = vpack.c.bf16 %v206, %v205
    %v235 = vld [vmem:[#allocation4 + $0x12] sm:$0x1]
    %v236 = vlaneseq
    %v237 = vshrl.u32 %v236, 7
    %v238 = vsub.s32 0, %v237
    %v239 = vrot.slane %v235, %v238
    %v244 = vunpack.c.l.b16 %v230
    %v245 = vunpack.c.l.b16 %v231
    %v246 = vunpack.c.l.b16 %v232
    %v247 = vunpack.c.l.b16 %v233
    %v248 = vpack.c.b16 %v245, %v244
    %v249 = vpack.c.b16 %v247, %v246
    %v253 = vsel %vm167, %v234, 0
    %255 = vmatprep.subr.bf16.mxu0 0
    %256 = vmatpush1.bf16.msra.mxu0 %v248
    %257 = vmatprep.subr.bf16.mxu0 0
    %258 = vmatpush1.bf16.msra.mxu0 %v249
    %259 = vmatprep.subr.bf16.mxu0 0
    %260 = vmatpush1.bf16.msra.mxu0 0
    %261 = vmatprep.subr.bf16.mxu0 0
    %262 = vmatpush1.bf16.msra.mxu0 0
    %263 = vmatprep.subr.bf16.mxu0 0
    %264 = vmatpush1.bf16.msra.mxu0 0
    %265 = vmatprep.subr.bf16.mxu0 0
    %266 = vmatpush1.bf16.msra.mxu0 0
    %267 = vmatprep.subr.bf16.mxu0 0
    %268 = vmatpush1.bf16.msra.mxu0 0
    %269 = vmatprep.subr.bf16.mxu0 0
    %270 = vmatpush1.bf16.msra.mxu0 0
    %271 = vmatprep.subr.bf16.mxu0 0
    %272 = vmatpush1.bf16.msra.mxu0 0
    %273 = vmatprep.subr.bf16.mxu0 0
    %274 = vmatpush1.bf16.msra.mxu0 0
    %275 = vmatprep.subr.bf16.mxu0 0
    %276 = vmatpush1.bf16.msra.mxu0 0
    %277 = vmatprep.subr.bf16.mxu0 0
    %278 = vmatpush1.bf16.msra.mxu0 0
    %279 = vmatprep.subr.bf16.mxu0 0
    %280 = vmatpush1.bf16.msra.mxu0 0
    %281 = vmatprep.subr.bf16.mxu0 0
    %282 = vmatpush1.bf16.msra.mxu0 0
    %283 = vmatprep.subr.bf16.mxu0 0
    %284 = vmatpush1.bf16.msra.mxu0 0
    %285 = vmatprep.subr.bf16.mxu0 0
    %286 = vmatpush1.bf16.msra.mxu0 0
    %287 = vmatprep.mubr.bf16.mxu0 0
    %288 = vmatmul.mubr.bf16.gmra.mrb[0].mxu0 %v253
    %v289 = vpop.f32.mrb[0].mxu0
    %v290 = vadd.f32 %v239, %v289
    %v291 = vpop.f32.mrb[0].mxu0
    %v292 = vpop.f32.mrb[0].mxu0
    %v293 = vadd.f32 %v239, %v292
    %v294 = vpop.f32.mrb[0].mxu0
    %295 = vdwg.mxu0
    %v296 = vpack.c.bf16 %v293, %v290
    %v297 = vmul.f32 %v290, %v224
    %v298 = vmul.f32 %v293, %v224
    %v299 = vpack.c.bf16 %v298, %v297
    %301 = vrot.lane.b32.xlu0 %v296, 96
    %v302 = vpop.permute.xlu0 %301
    %v304 = vsel %vm167, %v299, 0
    %v307 = vsel %vm167, %v302, 0
    %309 = vmatprep.subr.bf16.mxu0 0
    %310 = vmatpush1.bf16.xpose.msra.mxu0 %v307
    %311 = vmatprep.subr.bf16.mxu0 0
    %312 = vmatpush1.bf16.xpose.msra.mxu0 0
    %313 = vmatprep.subr.bf16.mxu0 0
    %314 = vmatpush1.bf16.xpose.msra.mxu0 0
    %315 = vmatprep.subr.bf16.mxu0 0
    %316 = vmatpush1.bf16.xpose.msra.mxu0 0
    %317 = vmatprep.subr.bf16.mxu0 0
    %318 = vmatpush1.bf16.xpose.msra.mxu0 0
    %319 = vmatprep.subr.bf16.mxu0 0
    %320 = vmatpush1.bf16.xpose.msra.mxu0 0
    %321 = vmatprep.subr.bf16.mxu0 0
    %322 = vmatpush1.bf16.xpose.msra.mxu0 0
    %323 = vmatprep.subr.bf16.mxu0 0
    %324 = vmatpush1.bf16.xpose.msra.mxu0 0
    %325 = vmatprep.subr.bf16.mxu0 0
    %326 = vmatpush1.bf16.xpose.msra.mxu0 0
    %327 = vmatprep.subr.bf16.mxu0 0
    %328 = vmatpush1.bf16.xpose.msra.mxu0 0
    %329 = vmatprep.subr.bf16.mxu0 0
    %330 = vmatpush1.bf16.xpose.msra.mxu0 0
    %331 = vmatprep.subr.bf16.mxu0 0
    %332 = vmatpush1.bf16.xpose.msra.mxu0 0
    %333 = vmatprep.subr.bf16.mxu0 0
    %334 = vmatpush1.bf16.xpose.msra.mxu0 0
    %335 = vmatprep.subr.bf16.mxu0 0
    %336 = vmatpush1.bf16.xpose.msra.mxu0 0
    %337 = vmatprep.subr.bf16.mxu0 0
    %338 = vmatpush1.bf16.xpose.msra.mxu0 0
    %339 = vmatprep.subr.bf16.mxu0 0
    %340 = vmatpush1.bf16.xpose.msra.mxu0 0
    %341 = vmatprep.mubr.bf16.mxu0 0
    %342 = vmatmul.mubr.bf16.gmra.mrb[0].mxu0 %v304
    %v343 = vpop.f32.mrb[0].mxu0
    %v344 = vadd.f32 0.0, %v343
    %v345 = vpop.f32.mrb[0].mxu0
    %v346 = vpop.f32.mrb[0].mxu0
    %v347 = vadd.f32 0.0, %v346
    %v348 = vpop.f32.mrb[0].mxu0
    %349 = vdwg.mxu0
    %v350 = vmul.f32 %v344, 0.25
    %v351 = vmul.f32 %v347, 0.25
    %v352 = vadd.f32 %v350, %v218
    %v353 = vadd.f32 %v351, %v219
    %vm354 = vcmask 130048
    %v355 = vsel %vm354, %v352, -inf
    %356 = vmax.xlane.f32.xlu0 %v355
    %v357 = vpop.xlane.xlu0 %356
    %v358 = vsel %vm354, %v353, -inf
    %359 = vmax.xlane.f32.xlu0 %v358
    %v360 = vpop.xlane.xlu0 %359
    %v361 = vsub.f32 %v352, %v357
    %v362 = vsub.f32 %v353, %v360
    %v363 = vmul.f32 %v361, 1.442695
    %v364 = vpow.pop %v363
    %v365 = vmul.f32 %v362, 1.442695
    %v366 = vpow.pop %v365
    %v367 = vsel %vm354, %v364, 0.0
    %368 = vadd.xlane.f32.xlu0 %v367
    %v369 = vpop.xlane.xlu0 %368
    %v370 = vsel %vm354, %v366, 0.0
    %371 = vadd.xlane.f32.xlu0 %v370
    %v372 = vpop.xlane.xlu0 %371
    %v373 = vrcp.pop %v369
    %v374 = vmul.f32 %v364, %v373
    %v375 = vrcp.pop %v372
    %v376 = vmul.f32 %v366, %v375
    %378 = vrot.lane.b32.xlu0 %v224, 64
    %v379 = vpop.permute.xlu0 %378
    %v381 = vmul.f32 %v290, %v379
    %v382 = vmul.f32 %v293, %v379
    %v383 = vpack.c.bf16 %v376, %v374
    %v384 = vpack.c.bf16 %v382, %v381
    %v385 = vmul.f32 %v290, %v229
    %v386 = vmul.f32 %v293, %v229
    %v387 = vpack.c.bf16 %v386, %v385
    %v389 = vsel %vm167, %v387, 0
    %391 = vmatprep.subr.bf16.mxu0 0
    %392 = vmatpush1.bf16.xpose.msra.mxu0 %v307
    %393 = vmatprep.subr.bf16.mxu0 0
    %394 = vmatpush1.bf16.xpose.msra.mxu0 0
    %395 = vmatprep.subr.bf16.mxu0 0
    %396 = vmatpush1.bf16.xpose.msra.mxu0 0
    %397 = vmatprep.subr.bf16.mxu0 0
    %398 = vmatpush1.bf16.xpose.msra.mxu0 0
    %399 = vmatprep.subr.bf16.mxu0 0
    %400 = vmatpush1.bf16.xpose.msra.mxu0 0
    %401 = vmatprep.subr.bf16.mxu0 0
    %402 = vmatpush1.bf16.xpose.msra.mxu0 0
    %403 = vmatprep.subr.bf16.mxu0 0
    %404 = vmatpush1.bf16.xpose.msra.mxu0 0
    %405 = vmatprep.subr.bf16.mxu0 0
    %406 = vmatpush1.bf16.xpose.msra.mxu0 0
    %407 = vmatprep.subr.bf16.mxu0 0
    %408 = vmatpush1.bf16.xpose.msra.mxu0 0
    %409 = vmatprep.subr.bf16.mxu0 0
    %410 = vmatpush1.bf16.xpose.msra.mxu0 0
    %411 = vmatprep.subr.bf16.mxu0 0
    %412 = vmatpush1.bf16.xpose.msra.mxu0 0
    %413 = vmatprep.subr.bf16.mxu0 0
    %414 = vmatpush1.bf16.xpose.msra.mxu0 0
    %415 = vmatprep.subr.bf16.mxu0 0
    %416 = vmatpush1.bf16.xpose.msra.mxu0 0
    %417 = vmatprep.subr.bf16.mxu0 0
    %418 = vmatpush1.bf16.xpose.msra.mxu0 0
    %419 = vmatprep.subr.bf16.mxu0 0
    %420 = vmatpush1.bf16.xpose.msra.mxu0 0
    %421 = vmatprep.subr.bf16.mxu0 0
    %422 = vmatpush1.bf16.xpose.msra.mxu0 0
    %423 = vmatprep.mubr.bf16.mxu0 0
    %424 = vmatmul.mubr.bf16.gmra.mrb[0].mxu0 %v389
    %v425 = vpop.f32.mrb[0].mxu0
    %v426 = vadd.f32 0.0, %v425
    %v427 = vpop.f32.mrb[0].mxu0
    %v428 = vpop.f32.mrb[0].mxu0
    %v429 = vadd.f32 0.0, %v428
    %v430 = vpop.f32.mrb[0].mxu0
    %431 = vdwg.mxu0
    %v432 = vmul.f32 %v426, 0.25
    %v433 = vmul.f32 %v429, 0.25
    %v434 = vadd.f32 %v432, %v218
    %v435 = vadd.f32 %v433, %v219
    %v436 = vsel %vm354, %v434, -inf
    %437 = vmax.xlane.f32.xlu0 %v436
    %v438 = vpop.xlane.xlu0 %437
    %v439 = vsel %vm354, %v435, -inf
    %440 = vmax.xlane.f32.xlu0 %v439
    %v441 = vpop.xlane.xlu0 %440
    %v442 = vsub.f32 %v434, %v438
    %v443 = vsub.f32 %v435, %v441
    %v444 = vmul.f32 %v442, 1.442695
    %v445 = vpow.pop %v444
    %v446 = vmul.f32 %v443, 1.442695
    %v447 = vpow.pop %v446
    %v448 = vsel %vm354, %v445, 0.0
    %449 = vadd.xlane.f32.xlu0 %v448
    %v450 = vpop.xlane.xlu0 %449
    %v451 = vsel %vm354, %v447, 0.0
    %452 = vadd.xlane.f32.xlu0 %v451
    %v453 = vpop.xlane.xlu0 %452
    %v454 = vrcp.pop %v450
    %v455 = vmul.f32 %v445, %v454
    %v456 = vrcp.pop %v453
    %v457 = vmul.f32 %v447, %v456
    %459 = vrot.lane.b32.xlu0 %v229, 64
    %v460 = vpop.permute.xlu0 %459
    %v462 = vmul.f32 %v290, %v460
    %v463 = vmul.f32 %v293, %v460
    %v464 = vpack.c.bf16 %v457, %v455
    %v465 = vpack.c.bf16 %v463, %v462
    %467 = vrot.lane.b32.xlu0 %v465, 64
    %v468 = vpop.permute.xlu0 %467
    %v471 = vsel %vm354, %v464, 0
    %473 = vmatprep.subr.bf16.mxu0 0
    %474 = vmatpush1.bf16.msra.mxu0 %v468
    %475 = vmatprep.subr.bf16.mxu0 0
    %476 = vmatpush1.bf16.msra.mxu0 0
    %477 = vmatprep.subr.bf16.mxu0 0
    %478 = vmatpush1.bf16.msra.mxu0 0
    %479 = vmatprep.subr.bf16.mxu0 0
    %480 = vmatpush1.bf16.msra.mxu0 0
    %481 = vmatprep.subr.bf16.mxu0 0
    %482 = vmatpush1.bf16.msra.mxu0 0
    %483 = vmatprep.subr.bf16.mxu0 0
    %484 = vmatpush1.bf16.msra.mxu0 0
    %485 = vmatprep.subr.bf16.mxu0 0
    %486 = vmatpush1.bf16.msra.mxu0 0
    %487 = vmatprep.subr.bf16.mxu0 0
    %488 = vmatpush1.bf16.msra.mxu0 0
    %489 = vmatprep.subr.bf16.mxu0 0
    %490 = vmatpush1.bf16.msra.mxu0 0
    %491 = vmatprep.subr.bf16.mxu0 0
    %492 = vmatpush1.bf16.msra.mxu0 0
    %493 = vmatprep.subr.bf16.mxu0 0
    %494 = vmatpush1.bf16.msra.mxu0 0
    %495 = vmatprep.subr.bf16.mxu0 0
    %496 = vmatpush1.bf16.msra.mxu0 0
    %497 = vmatprep.subr.bf16.mxu0 0
    %498 = vmatpush1.bf16.msra.mxu0 0
    %499 = vmatprep.subr.bf16.mxu0 0
    %500 = vmatpush1.bf16.msra.mxu0 0
    %501 = vmatprep.subr.bf16.mxu0 0
    %502 = vmatpush1.bf16.msra.mxu0 0
    %503 = vmatprep.subr.bf16.mxu0 0
    %504 = vmatpush1.bf16.msra.mxu0 0
    %505 = vmatprep.mubr.bf16.mxu0 0
    %506 = vmatmul.mubr.bf16.gmra.mrb[0].mxu0 %v471
    %v507 = vpop.f32.mrb[0].mxu0
    %v508 = vadd.f32 0.0, %v507
    %v509 = vpop.f32.mrb[0].mxu0
    %v510 = vpop.f32.mrb[0].mxu0
    %v511 = vadd.f32 0.0, %v510
    %v512 = vpop.f32.mrb[0].mxu0
    %513 = vdwg.mxu0
    %515 = vrot.lane.b32.xlu0 %v384, 64
    %v516 = vpop.permute.xlu0 %515
    %v519 = vsel %vm354, %v383, 0
    %521 = vmatprep.subr.bf16.mxu0 0
    %522 = vmatpush1.bf16.msra.mxu0 %v516
    %523 = vmatprep.subr.bf16.mxu0 0
    %524 = vmatpush1.bf16.msra.mxu0 0
    %525 = vmatprep.subr.bf16.mxu0 0
    %526 = vmatpush1.bf16.msra.mxu0 0
    %527 = vmatprep.subr.bf16.mxu0 0
    %528 = vmatpush1.bf16.msra.mxu0 0
    %529 = vmatprep.subr.bf16.mxu0 0
    %530 = vmatpush1.bf16.msra.mxu0 0
    %531 = vmatprep.subr.bf16.mxu0 0
    %532 = vmatpush1.bf16.msra.mxu0 0
    %533 = vmatprep.subr.bf16.mxu0 0
    %534 = vmatpush1.bf16.msra.mxu0 0
    %535 = vmatprep.subr.bf16.mxu0 0
    %536 = vmatpush1.bf16.msra.mxu0 0
    %537 = vmatprep.subr.bf16.mxu0 0
    %538 = vmatpush1.bf16.msra.mxu0 0
    %539 = vmatprep.subr.bf16.mxu0 0
    %540 = vmatpush1.bf16.msra.mxu0 0
    %541 = vmatprep.subr.bf16.mxu0 0
    %542 = vmatpush1.bf16.msra.mxu0 0
    %543 = vmatprep.subr.bf16.mxu0 0
    %544 = vmatpush1.bf16.msra.mxu0 0
    %545 = vmatprep.subr.bf16.mxu0 0
    %546 = vmatpush1.bf16.msra.mxu0 0
    %547 = vmatprep.subr.bf16.mxu0 0
    %548 = vmatpush1.bf16.msra.mxu0 0
    %549 = vmatprep.subr.bf16.mxu0 0
    %550 = vmatpush1.bf16.msra.mxu0 0
    %551 = vmatprep.subr.bf16.mxu0 0
    %552 = vmatpush1.bf16.msra.mxu0 0
    %553 = vmatprep.mubr.bf16.mxu0 0
    %554 = vmatmul.mubr.bf16.gmra.mrb[0].mxu0 %v519
    %v555 = vpop.f32.mrb[0].mxu0
    %v556 = vadd.f32 %v508, %v555
    %v557 = vpop.f32.mrb[0].mxu0
    %v558 = vpop.f32.mrb[0].mxu0
    %v559 = vadd.f32 %v511, %v558
    %v560 = vpop.f32.mrb[0].mxu0
    %561 = vdwg.mxu0
    %v562 = vld [vmem:[#allocation2 + $0x48] sm:$0xf]
    %v563 = vld [vmem:[#allocation2 + $0x4c] sm:$0xf]
    %v564 = vld [vmem:[#allocation2 + $0x50] sm:$0xf]
    %v565 = vld [vmem:[#allocation2 + $0x54] sm:$0xf]
    %v566 = vpack.c.bf16 %v559, %v556
    %v571 = vunpack.c.l.b16 %v562
    %v572 = vunpack.c.l.b16 %v563
    %v573 = vunpack.c.l.b16 %v564
    %v574 = vunpack.c.l.b16 %v565
    %v575 = vpack.c.b16 %v572, %v571
    %v576 = vpack.c.b16 %v574, %v573
    %580 = vrot.lane.b32.xlu0 %v239, 32
    %v581 = vpop.permute.xlu0 %580
    %v584 = vsel %vm167, %v566, 0
    %586 = vmatprep.subr.bf16.mxu0 0
    %587 = vmatpush1.bf16.msra.mxu0 %v575
    %588 = vmatprep.subr.bf16.mxu0 0
    %589 = vmatpush1.bf16.msra.mxu0 %v576
    %590 = vmatprep.subr.bf16.mxu0 0
    %591 = vmatpush1.bf16.msra.mxu0 0
    %592 = vmatprep.subr.bf16.mxu0 0
    %593 = vmatpush1.bf16.msra.mxu0 0
    %594 = vmatprep.subr.bf16.mxu0 0
    %595 = vmatpush1.bf16.msra.mxu0 0
    %596 = vmatprep.subr.bf16.mxu0 0
    %597 = vmatpush1.bf16.msra.mxu0 0
    %598 = vmatprep.subr.bf16.mxu0 0
    %599 = vmatpush1.bf16.msra.mxu0 0
    %600 = vmatprep.subr.bf16.mxu0 0
    %601 = vmatpush1.bf16.msra.mxu0 0
    %602 = vmatprep.subr.bf16.mxu0 0
    %603 = vmatpush1.bf16.msra.mxu0 0
    %604 = vmatprep.subr.bf16.mxu0 0
    %605 = vmatpush1.bf16.msra.mxu0 0
    %606 = vmatprep.subr.bf16.mxu0 0
    %607 = vmatpush1.bf16.msra.mxu0 0
    %608 = vmatprep.subr.bf16.mxu0 0
    %609 = vmatpush1.bf16.msra.mxu0 0
    %610 = vmatprep.subr.bf16.mxu0 0
    %611 = vmatpush1.bf16.msra.mxu0 0
    %612 = vmatprep.subr.bf16.mxu0 0
    %613 = vmatpush1.bf16.msra.mxu0 0
    %614 = vmatprep.subr.bf16.mxu0 0
    %615 = vmatpush1.bf16.msra.mxu0 0
    %616 = vmatprep.subr.bf16.mxu0 0
    %617 = vmatpush1.bf16.msra.mxu0 0
    %618 = vmatprep.mubr.bf16.mxu0 0
    %619 = vmatmul.mubr.bf16.gmra.mrb[0].mxu0 %v584
    %v620 = vpop.f32.mrb[0].mxu0
    %v621 = vadd.f32 %v581, %v620
    %v622 = vpop.f32.mrb[0].mxu0
    %v623 = vpop.f32.mrb[0].mxu0
    %v624 = vadd.f32 %v581, %v623
    %v625 = vpop.f32.mrb[0].mxu0
    %626 = vdwg.mxu0
    %v627 = vadd.f32 %v205, %v621
    %v628 = vadd.f32 %v206, %v624
    %v629 = vld [vmem:[#allocation4 + $0x14] sm:$0x1]
    %v630 = vsel %vm167, %v627, 0.0
    %631 = vadd.xlane.f32.xlu0 %v630
    %v632 = vpop.xlane.xlu0 %631
    %v633 = vsel %vm167, %v628, 0.0
    %634 = vadd.xlane.f32.xlu0 %v633
    %v635 = vpop.xlane.xlu0 %634
    %v636 = vmul.f32 %v632, %v174
    %v637 = vmul.f32 %v635, %v174
    %v638 = vsub.f32 %v627, %v636
    %v639 = vsub.f32 %v628, %v637
    %v640 = vmul.f32 %v638, %v638
    %v641 = vmul.f32 %v639, %v639
    %v642 = vsel %vm167, %v640, 0.0
    %643 = vadd.xlane.f32.xlu0 %v642
    %v644 = vpop.xlane.xlu0 %643
    %v645 = vsel %vm167, %v641, 0.0
    %646 = vadd.xlane.f32.xlu0 %v645
    %v647 = vpop.xlane.xlu0 %646
    %v648 = vmul.f32 %v644, %v174
    %v649 = vmul.f32 %v647, %v174
    %v650 = vadd.f32 %v648, 1e-12
    %v651 = vadd.f32 %v649, 1e-12
    %v652 = vrsqrt.pop %v650
    %v653 = vrsqrt.pop %v651
    %v654 = vmul.f32 %v638, %v652
    %v655 = vmul.f32 %v639, %v653
    %v656 = vlaneseq
    %v657 = vshrl.u32 %v656, 7
    %v658 = vsub.s32 0, %v657
    %v659 = vrot.slane %v629, %v658
    %v660 = vmul.f32 %v654, %v659
    %v661 = vmul.f32 %v655, %v659
    %663 = vrot.lane.b32.xlu0 %v659, 96
    %v664 = vpop.permute.xlu0 %663
    %v666 = vadd.f32 %v660, %v664
    %v667 = vadd.f32 %v661, %v664
    %v668 = vld [vmem:[#allocation2 + $0x58] sm:$0xf]
    %v669 = vld [vmem:[#allocation2 + $0x5c] sm:$0xf]
    %v670 = vld [vmem:[#allocation2 + $0x60] sm:$0xf]
    %v671 = vld [vmem:[#allocation2 + $0x64] sm:$0xf]
    %v672 = vpack.c.bf16 %v667, %v666
    %v673 = vld [vmem:[#allocation4 + $0x13] sm:$0x1]
    %v674 = vlaneseq
    %v675 = vshrl.u32 %v674, 7
    %v676 = vsub.s32 0, %v675
    %v677 = vrot.slane %v673, %v676
    %v682 = vunpack.c.l.b16 %v668
    %v683 = vunpack.c.l.b16 %v669
    %v684 = vunpack.c.l.b16 %v670
    %v685 = vunpack.c.l.b16 %v671
    %v686 = vpack.c.b16 %v683, %v682
    %v687 = vpack.c.b16 %v685, %v684
    %v691 = vsel %vm167, %v672, 0
    %693 = vmatprep.subr.bf16.mxu0 0
    %694 = vmatpush1.bf16.msra.mxu0 %v686
    %695 = vmatprep.subr.bf16.mxu0 0
    %696 = vmatpush1.bf16.msra.mxu0 %v687
    %697 = vmatprep.subr.bf16.mxu0 0
    %698 = vmatpush1.bf16.msra.mxu0 0
    %699 = vmatprep.subr.bf16.mxu0 0
    %700 = vmatpush1.bf16.msra.mxu0 0
    %701 = vmatprep.subr.bf16.mxu0 0
    %702 = vmatpush1.bf16.msra.mxu0 0
    %703 = vmatprep.subr.bf16.mxu0 0
    %704 = vmatpush1.bf16.msra.mxu0 0
    %705 = vmatprep.subr.bf16.mxu0 0
    %706 = vmatpush1.bf16.msra.mxu0 0
    %707 = vmatprep.subr.bf16.mxu0 0
    %708 = vmatpush1.bf16.msra.mxu0 0
    %709 = vmatprep.subr.bf16.mxu0 0
    %710 = vmatpush1.bf16.msra.mxu0 0
    %711 = vmatprep.subr.bf16.mxu0 0
    %712 = vmatpush1.bf16.msra.mxu0 0
    %713 = vmatprep.subr.bf16.mxu0 0
    %714 = vmatpush1.bf16.msra.mxu0 0
    %715 = vmatprep.subr.bf16.mxu0 0
    %716 = vmatpush1.bf16.msra.mxu0 0
    %717 = vmatprep.subr.bf16.mxu0 0
    %718 = vmatpush1.bf16.msra.mxu0 0
    %719 = vmatprep.subr.bf16.mxu0 0
    %720 = vmatpush1.bf16.msra.mxu0 0
    %721 = vmatprep.subr.bf16.mxu0 0
    %722 = vmatpush1.bf16.msra.mxu0 0
    %723 = vmatprep.subr.bf16.mxu0 0
    %724 = vmatpush1.bf16.msra.mxu0 0
    %725 = vmatprep.mubr.bf16.mxu0 0
    %726 = vmatmul.mubr.bf16.gmra.mrb[0].mxu0 %v691
    %v727 = vpop.f32.mrb[0].mxu0
    %v728 = vadd.f32 %v677, %v727
    %v729 = vpop.f32.mrb[0].mxu0
    %v730 = vpop.f32.mrb[0].mxu0
    %v731 = vadd.f32 %v677, %v730
    %v732 = vpop.f32.mrb[0].mxu0
    %733 = vdwg.mxu0
    %v734 = vmul.f32 %v728, 0.5
    %v735 = vmul.f32 %v731, 0.5
    %v736 = vmul.f32 %v728, 0.044715
    %v737 = vmul.f32 %v731, 0.044715
    %v738 = vmul.f32 %v736, %v728
    %v739 = vmul.f32 %v737, %v731
    %v740 = vmul.f32 %v738, %v728
    %v741 = vmul.f32 %v739, %v731
    %v742 = vadd.f32 %v728, %v740
    %v743 = vadd.f32 %v731, %v741
    %v744 = vmul.f32 %v742, 0.7978846
    %v745 = vmul.f32 %v743, 0.7978846
    %v746 = vtanh.pop %v744
    %v747 = vtanh.pop %v745
    %v748 = vadd.f32 %v746, 1.0
    %v749 = vadd.f32 %v747, 1.0
    %v750 = vmul.f32 %v734, %v748
    %v751 = vmul.f32 %v735, %v749
    %v752 = vld [vmem:[#allocation2 + $0x68] sm:$0xf]
    %v753 = vld [vmem:[#allocation2 + $0x6c] sm:$0xf]
    %v754 = vld [vmem:[#allocation2 + $0x70] sm:$0xf]
    %v755 = vld [vmem:[#allocation2 + $0x74] sm:$0xf]
    %v756 = vld [vmem:[#allocation2 + $0x78] sm:$0xf]
    %v757 = vld [vmem:[#allocation2 + $0x7c] sm:$0xf]
    %v758 = vld [vmem:[#allocation2 + $0x80] sm:$0xf]
    %v759 = vld [vmem:[#allocation2 + $0x84] sm:$0xf]
    %v760 = vpack.c.bf16 %v751, %v750
    %v769 = vunpack.c.l.b16 %v752
    %v770 = vunpack.c.l.b16 %v753
    %v771 = vunpack.c.l.b16 %v754
    %v772 = vunpack.c.l.b16 %v755
    %v773 = vunpack.c.l.b16 %v756
    %v774 = vunpack.c.l.b16 %v757
    %v775 = vunpack.c.l.b16 %v758
    %v776 = vunpack.c.l.b16 %v759
    %v777 = vpack.c.b16 %v770, %v769
    %v778 = vpack.c.b16 %v772, %v771
    %v779 = vpack.c.b16 %v774, %v773
    %v780 = vpack.c.b16 %v776, %v775
    %786 = vrot.lane.b32.xlu0 %v677, 64
    %v787 = vpop.permute.xlu0 %786
    %vm789 = vcmask 523264
    %v791 = vsel %vm789, %v760, 0
    %793 = vmatprep.subr.bf16.mxu0 0
    %794 = vmatpush1.bf16.msra.mxu0 %v777
    %795 = vmatprep.subr.bf16.mxu0 0
    %796 = vmatpush1.bf16.msra.mxu0 %v778
    %797 = vmatprep.subr.bf16.mxu0 0
    %798 = vmatpush1.bf16.msra.mxu0 %v779
    %799 = vmatprep.subr.bf16.mxu0 0
    %800 = vmatpush1.bf16.msra.mxu0 %v780
    %801 = vmatprep.subr.bf16.mxu0 0
    %802 = vmatpush1.bf16.msra.mxu0 0
    %803 = vmatprep.subr.bf16.mxu0 0
    %804 = vmatpush1.bf16.msra.mxu0 0
    %805 = vmatprep.subr.bf16.mxu0 0
    %806 = vmatpush1.bf16.msra.mxu0 0
    %807 = vmatprep.subr.bf16.mxu0 0
    %808 = vmatpush1.bf16.msra.mxu0 0
    %809 = vmatprep.subr.bf16.mxu0 0
    %810 = vmatpush1.bf16.msra.mxu0 0
    %811 = vmatprep.subr.bf16.mxu0 0
    %812 = vmatpush1.bf16.msra.mxu0 0
    %813 = vmatprep.subr.bf16.mxu0 0
    %814 = vmatpush1.bf16.msra.mxu0 0
    %815 = vmatprep.subr.bf16.mxu0 0
    %816 = vmatpush1.bf16.msra.mxu0 0
    %817 = vmatprep.subr.bf16.mxu0 0
    %818 = vmatpush1.bf16.msra.mxu0 0
    %819 = vmatprep.subr.bf16.mxu0 0
    %820 = vmatpush1.bf16.msra.mxu0 0
    %821 = vmatprep.subr.bf16.mxu0 0
    %822 = vmatpush1.bf16.msra.mxu0 0
    %823 = vmatprep.subr.bf16.mxu0 0
    %824 = vmatpush1.bf16.msra.mxu0 0
    %825 = vmatprep.mubr.bf16.mxu0 0
    %826 = vmatmul.mubr.bf16.gmra.mrb[0].mxu0 %v791
    %v827 = vpop.f32.mrb[0].mxu0
    %v828 = vadd.f32 %v787, %v827
    %v829 = vpop.f32.mrb[0].mxu0
    %v830 = vpop.f32.mrb[0].mxu0
    %v831 = vadd.f32 %v787, %v830
    %v832 = vpop.f32.mrb[0].mxu0
    %833 = vdwg.mxu0
    %v834 = vadd.f32 %v666, %v828
    %v835 = vadd.f32 %v667, %v831
    %v836 = vsel %vm167, %v834, 0.0
    %837 = vadd.xlane.f32.xlu0 %v836
    %v838 = vpop.xlane.xlu0 %837
    %v839 = vsel %vm167, %v835, 0.0
    %840 = vadd.xlane.f32.xlu0 %v839
    %v841 = vpop.xlane.xlu0 %840
    %v842 = vmul.f32 %v838, %v174
    %v843 = vmul.f32 %v841, %v174
    %v844 = vsub.f32 %v834, %v842
    %v845 = vsub.f32 %v835, %v843
    %v846 = vmul.f32 %v844, %v844
    %v847 = vmul.f32 %v845, %v845
    %v848 = vsel %vm167, %v846, 0.0
    %849 = vadd.xlane.f32.xlu0 %v848
    %v850 = vpop.xlane.xlu0 %849
    %v851 = vsel %vm167, %v847, 0.0
    %852 = vadd.xlane.f32.xlu0 %v851
    %v853 = vpop.xlane.xlu0 %852
    %v854 = vmul.f32 %v850, %v174
    %v855 = vmul.f32 %v853, %v174
    %v856 = vadd.f32 %v854, 1e-12
    %v857 = vadd.f32 %v855, 1e-12
    %v858 = vrsqrt.pop %v856
    %v859 = vrsqrt.pop %v857
    %v860 = vmul.f32 %v844, %v858
    %v861 = vmul.f32 %v845, %v859
    %862 = vrot.lane.b32.xlu0 %v659, 64
    %v863 = vpop.permute.xlu0 %862
    %v865 = vmul.f32 %v860, %v863
    %v866 = vmul.f32 %v861, %v863
    %867 = vrot.lane.b32.xlu0 %v659, 32
    %v868 = vpop.permute.xlu0 %867
    %v870 = vadd.f32 %v865, %v868
    %v871 = vadd.f32 %v866, %v868
    %v872 = vld [vmem:[#allocation2 + $0x88] sm:$0xf]
    %v873 = vld [vmem:[#allocation2 + $0x8c] sm:$0xf]
    %v874 = vld [vmem:[#allocation2 + $0x90] sm:$0xf]
    %v875 = vld [vmem:[#allocation2 + $0x94] sm:$0xf]
    %v876 = vpack.c.bf16 %v871, %v870
    %v877 = vld [vmem:[#allocation4 + $0x15] sm:$0x1]
    %v878 = vlaneseq
    %v879 = vshrl.u32 %v878, 7
    %v880 = vsub.s32 0, %v879
    %v881 = vrot.slane %v877, %v880
    %v886 = vunpack.c.l.b16 %v872
    %v887 = vunpack.c.l.b16 %v873
    %v888 = vunpack.c.l.b16 %v874
    %v889 = vunpack.c.l.b16 %v875
    %v890 = vpack.c.b16 %v887, %v886
    %v891 = vpack.c.b16 %v889, %v888
    %v895 = vsel %vm167, %v876, 0
    %897 = vmatprep.subr.bf16.mxu0 0
    %898 = vmatpush1.bf16.msra.mxu0 %v890
    %899 = vmatprep.subr.bf16.mxu0 0
    %900 = vmatpush1.bf16.msra.mxu0 %v891
    %901 = vmatprep.subr.bf16.mxu0 0
    %902 = vmatpush1.bf16.msra.mxu0 0
    %903 = vmatprep.subr.bf16.mxu0 0
    %904 = vmatpush1.bf16.msra.mxu0 0
    %905 = vmatprep.subr.bf16.mxu0 0
    %906 = vmatpush1.bf16.msra.mxu0 0
    %907 = vmatprep.subr.bf16.mxu0 0
    %908 = vmatpush1.bf16.msra.mxu0 0
    %909 = vmatprep.subr.bf16.mxu0 0
    %910 = vmatpush1.bf16.msra.mxu0 0
    %911 = vmatprep.subr.bf16.mxu0 0
    %912 = vmatpush1.bf16.msra.mxu0 0
    %913 = vmatprep.subr.bf16.mxu0 0
    %914 = vmatpush1.bf16.msra.mxu0 0
    %915 = vmatprep.subr.bf16.mxu0 0
    %916 = vmatpush1.bf16.msra.mxu0 0
    %917 = vmatprep.subr.bf16.mxu0 0
    %918 = vmatpush1.bf16.msra.mxu0 0
    %919 = vmatprep.subr.bf16.mxu0 0
    %920 = vmatpush1.bf16.msra.mxu0 0
    %921 = vmatprep.subr.bf16.mxu0 0
    %922 = vmatpush1.bf16.msra.mxu0 0
    %923 = vmatprep.subr.bf16.mxu0 0
    %924 = vmatpush1.bf16.msra.mxu0 0
    %925 = vmatprep.subr.bf16.mxu0 0
    %926 = vmatpush1.bf16.msra.mxu0 0
    %927 = vmatprep.subr.bf16.mxu0 0
    %928 = vmatpush1.bf16.msra.mxu0 0
    %929 = vmatprep.mubr.bf16.mxu0 0
    %930 = vmatmul.mubr.bf16.gmra.mrb[0].mxu0 %v895
    %v931 = vpop.f32.mrb[0].mxu0
    %v932 = vadd.f32 %v881, %v931
    %v933 = vpop.f32.mrb[0].mxu0
    %v934 = vpop.f32.mrb[0].mxu0
    %v935 = vadd.f32 %v881, %v934
    %v936 = vpop.f32.mrb[0].mxu0
    %937 = vdwg.mxu0
    %v938 = vpack.c.bf16 %v935, %v932
    %v939 = vmul.f32 %v932, %v224
    %v940 = vmul.f32 %v935, %v224
    %v941 = vpack.c.bf16 %v940, %v939
    %943 = vrot.lane.b32.xlu0 %v938, 96
    %v944 = vpop.permute.xlu0 %943
    %v946 = vsel %vm167, %v941, 0
    %v949 = vsel %vm167, %v944, 0
    %951 = vmatprep.subr.bf16.mxu0 0
    %952 = vmatpush1.bf16.xpose.msra.mxu0 %v949
    %953 = vmatprep.subr.bf16.mxu0 0
    %954 = vmatpush1.bf16.xpose.msra.mxu0 0
    %955 = vmatprep.subr.bf16.mxu0 0
    %956 = vmatpush1.bf16.xpose.msra.mxu0 0
    %957 = vmatprep.subr.bf16.mxu0 0
    %958 = vmatpush1.bf16.xpose.msra.mxu0 0
    %959 = vmatprep.subr.bf16.mxu0 0
    %960 = vmatpush1.bf16.xpose.msra.mxu0 0
    %961 = vmatprep.subr.bf16.mxu0 0
    %962 = vmatpush1.bf16.xpose.msra.mxu0 0
    %963 = vmatprep.subr.bf16.mxu0 0
    %964 = vmatpush1.bf16.xpose.msra.mxu0 0
    %965 = vmatprep.subr.bf16.mxu0 0
    %966 = vmatpush1.bf16.xpose.msra.mxu0 0
    %967 = vmatprep.subr.bf16.mxu0 0
    %968 = vmatpush1.bf16.xpose.msra.mxu0 0
    %969 = vmatprep.subr.bf16.mxu0 0
    %970 = vmatpush1.bf16.xpose.msra.mxu0 0
    %971 = vmatprep.subr.bf16.mxu0 0
    %972 = vmatpush1.bf16.xpose.msra.mxu0 0
    %973 = vmatprep.subr.bf16.mxu0 0
    %974 = vmatpush1.bf16.xpose.msra.mxu0 0
    %975 = vmatprep.subr.bf16.mxu0 0
    %976 = vmatpush1.bf16.xpose.msra.mxu0 0
    %977 = vmatprep.subr.bf16.mxu0 0
    %978 = vmatpush1.bf16.xpose.msra.mxu0 0
    %979 = vmatprep.subr.bf16.mxu0 0
    %980 = vmatpush1.bf16.xpose.msra.mxu0 0
    %981 = vmatprep.subr.bf16.mxu0 0
    %982 = vmatpush1.bf16.xpose.msra.mxu0 0
    %983 = vmatprep.mubr.bf16.mxu0 0
    %984 = vmatmul.mubr.bf16.gmra.mrb[0].mxu0 %v946
    %v985 = vpop.f32.mrb[0].mxu0
    %v986 = vadd.f32 0.0, %v985
    %v987 = vpop.f32.mrb[0].mxu0
    %v988 = vpop.f32.mrb[0].mxu0
    %v989 = vadd.f32 0.0, %v988
    %v990 = vpop.f32.mrb[0].mxu0
    %991 = vdwg.mxu0
    %v992 = vmul.f32 %v986, 0.25
    %v993 = vmul.f32 %v989, 0.25
    %v994 = vadd.f32 %v992, %v218
    %v995 = vadd.f32 %v993, %v219
    %v996 = vsel %vm354, %v994, -inf
    %997 = vmax.xlane.f32.xlu0 %v996
    %v998 = vpop.xlane.xlu0 %997
    %v999 = vsel %vm354, %v995, -inf
    %1000 = vmax.xlane.f32.xlu0 %v999
    %v1001 = vpop.xlane.xlu0 %1000
    %v1002 = vsub.f32 %v994, %v998
    %v1003 = vsub.f32 %v995, %v1001
    %v1004 = vmul.f32 %v1002, 1.442695
    %v1005 = vpow.pop %v1004
    %v1006 = vmul.f32 %v1003, 1.442695
    %v1007 = vpow.pop %v1006
    %v1008 = vsel %vm354, %v1005, 0.0
    %1009 = vadd.xlane.f32.xlu0 %v1008
    %v1010 = vpop.xlane.xlu0 %1009
    %v1011 = vsel %vm354, %v1007, 0.0
    %1012 = vadd.xlane.f32.xlu0 %v1011
    %v1013 = vpop.xlane.xlu0 %1012
    %v1014 = vrcp.pop %v1010
    %v1015 = vmul.f32 %v1005, %v1014
    %v1016 = vrcp.pop %v1013
    %v1017 = vmul.f32 %v1007, %v1016
    %v1018 = vmul.f32 %v932, %v379
    %v1019 = vmul.f32 %v935, %v379
    %v1020 = vpack.c.bf16 %v1017, %v1015
    %v1021 = vpack.c.bf16 %v1019, %v1018
    %v1022 = vmul.f32 %v932, %v229
    %v1023 = vmul.f32 %v935, %v229
    %v1024 = vpack.c.bf16 %v1023, %v1022
    %v1026 = vsel %vm167, %v1024, 0
    %1028 = vmatprep.subr.bf16.mxu0 0
    %1029 = vmatpush1.bf16.xpose.msra.mxu0 %v949
    %1030 = vmatprep.subr.bf16.mxu0 0
    %1031 = vmatpush1.bf16.xpose.msra.mxu0 0
    %1032 = vmatprep.subr.bf16.mxu0 0
    %1033 = vmatpush1.bf16.xpose.msra.mxu0 0
    %1034 = vmatprep.subr.bf16.mxu0 0
    %1035 = vmatpush1.bf16.xpose.msra.mxu0 0
    %1036 = vmatprep.subr.bf16.mxu0 0
    %1037 = vmatpush1.bf16.xpose.msra.mxu0 0
    %1038 = vmatprep.subr.bf16.mxu0 0
    %1039 = vmatpush1.bf16.xpose.msra.mxu0 0
    %1040 = vmatprep.subr.bf16.mxu0 0
    %1041 = vmatpush1.bf16.xpose.msra.mxu0 0
    %1042 = vmatprep.subr.bf16.mxu0 0
    %1043 = vmatpush1.bf16.xpose.msra.mxu0 0
    %1044 = vmatprep.subr.bf16.mxu0 0
    %1045 = vmatpush1.bf16.xpose.msra.mxu0 0
    %1046 = vmatprep.subr.bf16.mxu0 0
    %1047 = vmatpush1.bf16.xpose.msra.mxu0 0
    %1048 = vmatprep.subr.bf16.mxu0 0
    %1049 = vmatpush1.bf16.xpose.msra.mxu0 0
    %1050 = vmatprep.subr.bf16.mxu0 0
    %1051 = vmatpush1.bf16.xpose.msra.mxu0 0
    %1052 = vmatprep.subr.bf16.mxu0 0
    %1053 = vmatpush1.bf16.xpose.msra.mxu0 0
    %1054 = vmatprep.subr.bf16.mxu0 0
    %1055 = vmatpush1.bf16.xpose.msra.mxu0 0
    %1056 = vmatprep.subr.bf16.mxu0 0
    %1057 = vmatpush1.bf16.xpose.msra.mxu0 0
    %1058 = vmatprep.subr.bf16.mxu0 0
    %1059 = vmatpush1.bf16.xpose.msra.mxu0 0
    %1060 = vmatprep.mubr.bf16.mxu0 0
    %1061 = vmatmul.mubr.bf16.gmra.mrb[0].mxu0 %v1026
    %v1062 = vpop.f32.mrb[0].mxu0
    %v1063 = vadd.f32 0.0, %v1062
    %v1064 = vpop.f32.mrb[0].mxu0
    %v1065 = vpop.f32.mrb[0].mxu0
    %v1066 = vadd.f32 0.0, %v1065
    %v1067 = vpop.f32.mrb[0].mxu0
    %1068 = vdwg.mxu0
    %v1069 = vmul.f32 %v1063, 0.25
    %v1070 = vmul.f32 %v1066, 0.25
    %v1071 = vadd.f32 %v1069, %v218
    %v1072 = vadd.f32 %v1070, %v219
    %v1073 = vsel %vm354, %v1071, -inf
    %1074 = vmax.xlane.f32.xlu0 %v1073
    %v1075 = vpop.xlane.xlu0 %1074
    %v1076 = vsel %vm354, %v1072, -inf
    %1077 = vmax.xlane.f32.xlu0 %v1076
    %v1078 = vpop.xlane.xlu0 %1077
    %v1079 = vsub.f32 %v1071, %v1075
    %v1080 = vsub.f32 %v1072, %v1078
    %v1081 = vmul.f32 %v1079, 1.442695
    %v1082 = vpow.pop %v1081
    %v1083 = vmul.f32 %v1080, 1.442695
    %v1084 = vpow.pop %v1083
    %v1085 = vsel %vm354, %v1082, 0.0
    %1086 = vadd.xlane.f32.xlu0 %v1085
    %v1087 = vpop.xlane.xlu0 %1086
    %v1088 = vsel %vm354, %v1084, 0.0
    %1089 = vadd.xlane.f32.xlu0 %v1088
    %v1090 = vpop.xlane.xlu0 %1089
    %v1091 = vrcp.pop %v1087
    %v1092 = vmul.f32 %v1082, %v1091
    %v1093 = vrcp.pop %v1090
    %v1094 = vmul.f32 %v1084, %v1093
    %v1095 = vmul.f32 %v932, %v460
    %v1096 = vmul.f32 %v935, %v460
    %v1097 = vpack.c.bf16 %v1094, %v1092
    %v1098 = vpack.c.bf16 %v1096, %v1095
    %1100 = vrot.lane.b32.xlu0 %v1098, 64
    %v1101 = vpop.permute.xlu0 %1100
    %v1104 = vsel %vm354, %v1097, 0
    %1106 = vmatprep.subr.bf16.mxu0 0
    %1107 = vmatpush1.bf16.msra.mxu0 %v1101
    %1108 = vmatprep.subr.bf16.mxu0 0
    %1109 = vmatpush1.bf16.msra.mxu0 0
    %1110 = vmatprep.subr.bf16.mxu0 0
    %1111 = vmatpush1.bf16.msra.mxu0 0
    %1112 = vmatprep.subr.bf16.mxu0 0
    %1113 = vmatpush1.bf16.msra.mxu0 0
    %1114 = vmatprep.subr.bf16.mxu0 0
    %1115 = vmatpush1.bf16.msra.mxu0 0
    %1116 = vmatprep.subr.bf16.mxu0 0
    %1117 = vmatpush1.bf16.msra.mxu0 0
    %1118 = vmatprep.subr.bf16.mxu0 0
    %1119 = vmatpush1.bf16.msra.mxu0 0
    %1120 = vmatprep.subr.bf16.mxu0 0
    %1121 = vmatpush1.bf16.msra.mxu0 0
    %1122 = vmatprep.subr.bf16.mxu0 0
    %1123 = vmatpush1.bf16.msra.mxu0 0
    %1124 = vmatprep.subr.bf16.mxu0 0
    %1125 = vmatpush1.bf16.msra.mxu0 0
    %1126 = vmatprep.subr.bf16.mxu0 0
    %1127 = vmatpush1.bf16.msra.mxu0 0
    %1128 = vmatprep.subr.bf16.mxu0 0
    %1129 = vmatpush1.bf16.msra.mxu0 0
    %1130 = vmatprep.subr.bf16.mxu0 0
    %1131 = vmatpush1.bf16.msra.mxu0 0
    %1132 = vmatprep.subr.bf16.mxu0 0
    %1133 = vmatpush1.bf16.msra.mxu0 0
    %1134 = vmatprep.subr.bf16.mxu0 0
    %1135 = vmatpush1.bf16.msra.mxu0 0
    %1136 = vmatprep.subr.bf16.mxu0 0
    %1137 = vmatpush1.bf16.msra.mxu0 0
    %1138 = vmatprep.mubr.bf16.mxu0 0
    %1139 = vmatmul.mubr.bf16.gmra.mrb[0].mxu0 %v1104
    %v1140 = vpop.f32.mrb[0].mxu0
    %v1141 = vadd.f32 0.0, %v1140
    %v1142 = vpop.f32.mrb[0].mxu0
    %v1143 = vpop.f32.mrb[0].mxu0
    %v1144 = vadd.f32 0.0, %v1143
    %v1145 = vpop.f32.mrb[0].mxu0
    %1146 = vdwg.mxu0
    %1148 = vrot.lane.b32.xlu0 %v1021, 64
    %v1149 = vpop.permute.xlu0 %1148
    %v1152 = vsel %vm354, %v1020, 0
    %1154 = vmatprep.subr.bf16.mxu0 0
    %1155 = vmatpush1.bf16.msra.mxu0 %v1149
    %1156 = vmatprep.subr.bf16.mxu0 0
    %1157 = vmatpush1.bf16.msra.mxu0 0
    %1158 = vmatprep.subr.bf16.mxu0 0
    %1159 = vmatpush1.bf16.msra.mxu0 0
    %1160 = vmatprep.subr.bf16.mxu0 0
    %1161 = vmatpush1.bf16.msra.mxu0 0
    %1162 = vmatprep.subr.bf16.mxu0 0
    %1163 = vmatpush1.bf16.msra.mxu0 0
    %1164 = vmatprep.subr.bf16.mxu0 0
    %1165 = vmatpush1.bf16.msra.mxu0 0
    %1166 = vmatprep.subr.bf16.mxu0 0
    %1167 = vmatpush1.bf16.msra.mxu0 0
    %1168 = vmatprep.subr.bf16.mxu0 0
    %1169 = vmatpush1.bf16.msra.mxu0 0
    %1170 = vmatprep.subr.bf16.mxu0 0
    %1171 = vmatpush1.bf16.msra.mxu0 0
    %1172 = vmatprep.subr.bf16.mxu0 0
    %1173 = vmatpush1.bf16.msra.mxu0 0
    %1174 = vmatprep.subr.bf16.mxu0 0
    %1175 = vmatpush1.bf16.msra.mxu0 0
    %1176 = vmatprep.subr.bf16.mxu0 0
    %1177 = vmatpush1.bf16.msra.mxu0 0
    %1178 = vmatprep.subr.bf16.mxu0 0
    %1179 = vmatpush1.bf16.msra.mxu0 0
    %1180 = vmatprep.subr.bf16.mxu0 0
    %1181 = vmatpush1.bf16.msra.mxu0 0
    %1182 = vmatprep.subr.bf16.mxu0 0
    %1183 = vmatpush1.bf16.msra.mxu0 0
    %1184 = vmatprep.subr.bf16.mxu0 0
    %1185 = vmatpush1.bf16.msra.mxu0 0
    %1186 = vmatprep.mubr.bf16.mxu0 0
    %1187 = vmatmul.mubr.bf16.gmra.mrb[0].mxu0 %v1152
    %v1188 = vpop.f32.mrb[0].mxu0
    %v1189 = vadd.f32 %v1141, %v1188
    %v1190 = vpop.f32.mrb[0].mxu0
    %v1191 = vpop.f32.mrb[0].mxu0
    %v1192 = vadd.f32 %v1144, %v1191
    %v1193 = vpop.f32.mrb[0].mxu0
    %1194 = vdwg.mxu0
    %v1195 = vld [vmem:[#allocation2 + $0x98] sm:$0xf]
    %v1196 = vld [vmem:[#allocation2 + $0x9c] sm:$0xf]
    %v1197 = vld [vmem:[#allocation2 + $0xa0] sm:$0xf]
    %v1198 = vld [vmem:[#allocation2 + $0xa4] sm:$0xf]
    %v1199 = vpack.c.bf16 %v1192, %v1189
    %v1204 = vunpack.c.l.b16 %v1195
    %v1205 = vunpack.c.l.b16 %v1196
    %v1206 = vunpack.c.l.b16 %v1197
    %v1207 = vunpack.c.l.b16 %v1198
    %v1208 = vpack.c.b16 %v1205, %v1204
    %v1209 = vpack.c.b16 %v1207, %v1206
    %1213 = vrot.lane.b32.xlu0 %v881, 32
    %v1214 = vpop.permute.xlu0 %1213
    %v1217 = vsel %vm167, %v1199, 0
    %1219 = vmatprep.subr.bf16.mxu0 0
    %1220 = vmatpush1.bf16.msra.mxu0 %v1208
    %1221 = vmatprep.subr.bf16.mxu0 0
    %1222 = vmatpush1.bf16.msra.mxu0 %v1209
    %1223 = vmatprep.subr.bf16.mxu0 0
    %1224 = vmatpush1.bf16.msra.mxu0 0
    %1225 = vmatprep.subr.bf16.mxu0 0
    %1226 = vmatpush1.bf16.msra.mxu0 0
    %1227 = vmatprep.subr.bf16.mxu0 0
    %1228 = vmatpush1.bf16.msra.mxu0 0
    %1229 = vmatprep.subr.bf16.mxu0 0
    %1230 = vmatpush1.bf16.msra.mxu0 0
    %1231 = vmatprep.subr.bf16.mxu0 0
    %1232 = vmatpush1.bf16.msra.mxu0 0
    %1233 = vmatprep.subr.bf16.mxu0 0
    %1234 = vmatpush1.bf16.msra.mxu0 0
    %1235 = vmatprep.subr.bf16.mxu0 0
    %1236 = vmatpush1.bf16.msra.mxu0 0
    %1237 = vmatprep.subr.bf16.mxu0 0
    %1238 = vmatpush1.bf16.msra.mxu0 0
    %1239 = vmatprep.subr.bf16.mxu0 0
    %1240 = vmatpush1.bf16.msra.mxu0 0
    %1241 = vmatprep.subr.bf16.mxu0 0
    %1242 = vmatpush1.bf16.msra.mxu0 0
    %1243 = vmatprep.subr.bf16.mxu0 0
    %1244 = vmatpush1.bf16.msra.mxu0 0
    %1245 = vmatprep.subr.bf16.mxu0 0
    %1246 = vmatpush1.bf16.msra.mxu0 0
    %1247 = vmatprep.subr.bf16.mxu0 0
    %1248 = vmatpush1.bf16.msra.mxu0 0
    %1249 = vmatprep.subr.bf16.mxu0 0
    %1250 = vmatpush1.bf16.msra.mxu0 0
    %1251 = vmatprep.mubr.bf16.mxu0 0
    %1252 = vmatmul.mubr.bf16.gmra.mrb[0].mxu0 %v1217
    %v1253 = vpop.f32.mrb[0].mxu0
    %v1254 = vadd.f32 %v1214, %v1253
    %v1255 = vpop.f32.mrb[0].mxu0
    %v1256 = vpop.f32.mrb[0].mxu0
    %v1257 = vadd.f32 %v1214, %v1256
    %v1258 = vpop.f32.mrb[0].mxu0
    %1259 = vdwg.mxu0
    %v1260 = vadd.f32 %v870, %v1254
    %v1261 = vadd.f32 %v871, %v1257
    %v1262 = vld [vmem:[#allocation4 + $0x17] sm:$0x1]
    %v1263 = vsel %vm167, %v1260, 0.0
    %1264 = vadd.xlane.f32.xlu0 %v1263
    %v1265 = vpop.xlane.xlu0 %1264
    %v1266 = vsel %vm167, %v1261, 0.0
    %1267 = vadd.xlane.f32.xlu0 %v1266
    %v1268 = vpop.xlane.xlu0 %1267
    %v1269 = vmul.f32 %v1265, %v174
    %v1270 = vmul.f32 %v1268, %v174
    %v1271 = vsub.f32 %v1260, %v1269
    %v1272 = vsub.f32 %v1261, %v1270
    %v1273 = vmul.f32 %v1271, %v1271
    %v1274 = vmul.f32 %v1272, %v1272
    %v1275 = vsel %vm167, %v1273, 0.0
    %1276 = vadd.xlane.f32.xlu0 %v1275
    %v1277 = vpop.xlane.xlu0 %1276
    %v1278 = vsel %vm167, %v1274, 0.0
    %1279 = vadd.xlane.f32.xlu0 %v1278
    %v1280 = vpop.xlane.xlu0 %1279
    %v1281 = vmul.f32 %v1277, %v174
    %v1282 = vmul.f32 %v1280, %v174
    %v1283 = vadd.f32 %v1281, 1e-12
    %v1284 = vadd.f32 %v1282, 1e-12
    %v1285 = vrsqrt.pop %v1283
    %v1286 = vrsqrt.pop %v1284
    %v1287 = vmul.f32 %v1271, %v1285
    %v1288 = vmul.f32 %v1272, %v1286
    %v1289 = vlaneseq
    %v1290 = vshrl.u32 %v1289, 7
    %v1291 = vsub.s32 0, %v1290
    %v1292 = vrot.slane %v1262, %v1291
    %v1293 = vmul.f32 %v1287, %v1292
    %v1294 = vmul.f32 %v1288, %v1292
    %1296 = vrot.lane.b32.xlu0 %v1292, 96
    %v1297 = vpop.permute.xlu0 %1296
    %v1299 = vadd.f32 %v1293, %v1297
    %v1300 = vadd.f32 %v1294, %v1297
    %v1301 = vld [vmem:[#allocation2 + $0xa8] sm:$0xf]
    %v1302 = vld [vmem:[#allocation2 + $0xac] sm:$0xf]
    %v1303 = vld [vmem:[#allocation2 + $0xb0] sm:$0xf]
    %v1304 = vld [vmem:[#allocation2 + $0xb4] sm:$0xf]
    %v1305 = vpack.c.bf16 %v1300, %v1299
    %v1306 = vld [vmem:[#allocation4 + $0x16] sm:$0x1]
    %v1307 = vlaneseq
    %v1308 = vshrl.u32 %v1307, 7
    %v1309 = vsub.s32 0, %v1308
    %v1310 = vrot.slane %v1306, %v1309
    %v1315 = vunpack.c.l.b16 %v1301
    %v1316 = vunpack.c.l.b16 %v1302
    %v1317 = vunpack.c.l.b16 %v1303
    %v1318 = vunpack.c.l.b16 %v1304
    %v1319 = vpack.c.b16 %v1316, %v1315
    %v1320 = vpack.c.b16 %v1318, %v1317
    %v1324 = vsel %vm167, %v1305, 0
    %1326 = vmatprep.subr.bf16.mxu0 0
    %1327 = vmatpush1.bf16.msra.mxu0 %v1319
    %1328 = vmatprep.subr.bf16.mxu0 0
    %1329 = vmatpush1.bf16.msra.mxu0 %v1320
    %1330 = vmatprep.subr.bf16.mxu0 0
    %1331 = vmatpush1.bf16.msra.mxu0 0
    %1332 = vmatprep.subr.bf16.mxu0 0
    %1333 = vmatpush1.bf16.msra.mxu0 0
    %1334 = vmatprep.subr.bf16.mxu0 0
    %1335 = vmatpush1.bf16.msra.mxu0 0
    %1336 = vmatprep.subr.bf16.mxu0 0
    %1337 = vmatpush1.bf16.msra.mxu0 0
    %1338 = vmatprep.subr.bf16.mxu0 0
    %1339 = vmatpush1.bf16.msra.mxu0 0
    %1340 = vmatprep.subr.bf16.mxu0 0
    %1341 = vmatpush1.bf16.msra.mxu0 0
    %1342 = vmatprep.subr.bf16.mxu0 0
    %1343 = vmatpush1.bf16.msra.mxu0 0
    %1344 = vmatprep.subr.bf16.mxu0 0
    %1345 = vmatpush1.bf16.msra.mxu0 0
    %1346 = vmatprep.subr.bf16.mxu0 0
    %1347 = vmatpush1.bf16.msra.mxu0 0
    %1348 = vmatprep.subr.bf16.mxu0 0
    %1349 = vmatpush1.bf16.msra.mxu0 0
    %1350 = vmatprep.subr.bf16.mxu0 0
    %1351 = vmatpush1.bf16.msra.mxu0 0
    %1352 = vmatprep.subr.bf16.mxu0 0
    %1353 = vmatpush1.bf16.msra.mxu0 0
    %1354 = vmatprep.subr.bf16.mxu0 0
    %1355 = vmatpush1.bf16.msra.mxu0 0
    %1356 = vmatprep.subr.bf16.mxu0 0
    %1357 = vmatpush1.bf16.msra.mxu0 0
    %1358 = vmatprep.mubr.bf16.mxu0 0
    %1359 = vmatmul.mubr.bf16.gmra.mrb[0].mxu0 %v1324
    %v1360 = vpop.f32.mrb[0].mxu0
    %v1361 = vadd.f32 %v1310, %v1360
    %v1362 = vpop.f32.mrb[0].mxu0
    %v1363 = vpop.f32.mrb[0].mxu0
    %v1364 = vadd.f32 %v1310, %v1363
    %v1365 = vpop.f32.mrb[0].mxu0
    %1366 = vdwg.mxu0
    %v1367 = vmul.f32 %v1361, 0.5
    %v1368 = vmul.f32 %v1364, 0.5
    %v1369 = vmul.f32 %v1361, 0.044715
    %v1370 = vmul.f32 %v1364, 0.044715
    %v1371 = vmul.f32 %v1369, %v1361
    %v1372 = vmul.f32 %v1370, %v1364
    %v1373 = vmul.f32 %v1371, %v1361
    %v1374 = vmul.f32 %v1372, %v1364
    %v1375 = vadd.f32 %v1361, %v1373
    %v1376 = vadd.f32 %v1364, %v1374
    %v1377 = vmul.f32 %v1375, 0.7978846
    %v1378 = vmul.f32 %v1376, 0.7978846
    %v1379 = vtanh.pop %v1377
    %v1380 = vtanh.pop %v1378
    %v1381 = vadd.f32 %v1379, 1.0
    %v1382 = vadd.f32 %v1380, 1.0
    %v1383 = vmul.f32 %v1367, %v1381
    %v1384 = vmul.f32 %v1368, %v1382
    %v1385 = vld [vmem:[#allocation2 + $0xb8] sm:$0xf]
    %v1386 = vld [vmem:[#allocation2 + $0xbc] sm:$0xf]
    %v1387 = vld [vmem:[#allocation2 + $0xc0] sm:$0xf]
    %v1388 = vld [vmem:[#allocation2 + $0xc4] sm:$0xf]
    %v1389 = vld [vmem:[#allocation2 + $0xc8] sm:$0xf]
    %v1390 = vld [vmem:[#allocation2 + $0xcc] sm:$0xf]
    %v1391 = vld [vmem:[#allocation2 + $0xd0] sm:$0xf]
    %v1392 = vld [vmem:[#allocation2 + $0xd4] sm:$0xf]
    %v1393 = vpack.c.bf16 %v1384, %v1383
    %v1402 = vunpack.c.l.b16 %v1385
    %v1403 = vunpack.c.l.b16 %v1386
    %v1404 = vunpack.c.l.b16 %v1387
    %v1405 = vunpack.c.l.b16 %v1388
    %v1406 = vunpack.c.l.b16 %v1389
    %v1407 = vunpack.c.l.b16 %v1390
    %v1408 = vunpack.c.l.b16 %v1391
    %v1409 = vunpack.c.l.b16 %v1392
    %v1410 = vpack.c.b16 %v1403, %v1402
    %v1411 = vpack.c.b16 %v1405, %v1404
    %v1412 = vpack.c.b16 %v1407, %v1406
    %v1413 = vpack.c.b16 %v1409, %v1408
    %1419 = vrot.lane.b32.xlu0 %v1310, 64
    %v1420 = vpop.permute.xlu0 %1419
    %v1423 = vsel %vm789, %v1393, 0
    %1425 = vmatprep.subr.bf16.mxu0 0
    %1426 = vmatpush1.bf16.msra.mxu0 %v1410
    %1427 = vmatprep.subr.bf16.mxu0 0
    %1428 = vmatpush1.bf16.msra.mxu0 %v1411
    %1429 = vmatprep.subr.bf16.mxu0 0
    %1430 = vmatpush1.bf16.msra.mxu0 %v1412
    %1431 = vmatprep.subr.bf16.mxu0 0
    %1432 = vmatpush1.bf16.msra.mxu0 %v1413
    %1433 = vmatprep.subr.bf16.mxu0 0
    %1434 = vmatpush1.bf16.msra.mxu0 0
    %1435 = vmatprep.subr.bf16.mxu0 0
    %1436 = vmatpush1.bf16.msra.mxu0 0
    %1437 = vmatprep.subr.bf16.mxu0 0
    %1438 = vmatpush1.bf16.msra.mxu0 0
    %1439 = vmatprep.subr.bf16.mxu0 0
    %1440 = vmatpush1.bf16.msra.mxu0 0
    %1441 = vmatprep.subr.bf16.mxu0 0
    %1442 = vmatpush1.bf16.msra.mxu0 0
    %1443 = vmatprep.subr.bf16.mxu0 0
    %1444 = vmatpush1.bf16.msra.mxu0 0
    %1445 = vmatprep.subr.bf16.mxu0 0
    %1446 = vmatpush1.bf16.msra.mxu0 0
    %1447 = vmatprep.subr.bf16.mxu0 0
    %1448 = vmatpush1.bf16.msra.mxu0 0
    %1449 = vmatprep.subr.bf16.mxu0 0
    %1450 = vmatpush1.bf16.msra.mxu0 0
    %1451 = vmatprep.subr.bf16.mxu0 0
    %1452 = vmatpush1.bf16.msra.mxu0 0
    %1453 = vmatprep.subr.bf16.mxu0 0
    %1454 = vmatpush1.bf16.msra.mxu0 0
    %1455 = vmatprep.subr.bf16.mxu0 0
    %1456 = vmatpush1.bf16.msra.mxu0 0
    %1457 = vmatprep.mubr.bf16.mxu0 0
    %1458 = vmatmul.mubr.bf16.gmra.mrb[0].mxu0 %v1423
    %v1459 = vpop.f32.mrb[0].mxu0
    %v1460 = vadd.f32 %v1420, %v1459
    %v1461 = vpop.f32.mrb[0].mxu0
    %v1462 = vpop.f32.mrb[0].mxu0
    %v1463 = vadd.f32 %v1420, %v1462
    %v1464 = vpop.f32.mrb[0].mxu0
    %1465 = vdwg.mxu0
    %v1466 = vadd.f32 %v1299, %v1460
    %v1467 = vadd.f32 %v1300, %v1463
    %v1468 = vsel %vm167, %v1466, 0.0
    %1469 = vadd.xlane.f32.xlu0 %v1468
    %v1470 = vpop.xlane.xlu0 %1469
    %v1471 = vsel %vm167, %v1467, 0.0
    %1472 = vadd.xlane.f32.xlu0 %v1471
    %v1473 = vpop.xlane.xlu0 %1472
    %v1474 = vmul.f32 %v1470, %v174
    %v1475 = vmul.f32 %v1473, %v174
    %v1476 = vsub.f32 %v1466, %v1474
    %v1477 = vsub.f32 %v1467, %v1475
    %v1478 = vmul.f32 %v1476, %v1476
    %v1479 = vmul.f32 %v1477, %v1477
    %v1480 = vsel %vm167, %v1478, 0.0
    %1481 = vadd.xlane.f32.xlu0 %v1480
    %v1482 = vpop.xlane.xlu0 %1481
    %v1483 = vsel %vm167, %v1479, 0.0
    %1484 = vadd.xlane.f32.xlu0 %v1483
    %v1485 = vpop.xlane.xlu0 %1484
    %v1486 = vmul.f32 %v1482, %v174
    %v1487 = vmul.f32 %v1485, %v174
    %v1488 = vadd.f32 %v1486, 1e-12
    %v1489 = vadd.f32 %v1487, 1e-12
    %v1490 = vrsqrt.pop %v1488
    %v1491 = vrsqrt.pop %v1489
    %v1492 = vmul.f32 %v1476, %v1490
    %v1493 = vmul.f32 %v1477, %v1491
    %1494 = vrot.lane.b32.xlu0 %v1292, 64
    %v1495 = vpop.permute.xlu0 %1494
    %v1497 = vmul.f32 %v1492, %v1495
    %v1498 = vmul.f32 %v1493, %v1495
    %1499 = vrot.lane.b32.xlu0 %v1292, 32
    %v1500 = vpop.permute.xlu0 %1499
    %v1502 = vadd.f32 %v1497, %v1500
    %v1503 = vadd.f32 %v1498, %v1500
    %v1505 = vrot.slane %v1503, 7
    %vm1507 = vcmask 1040384
    %v1508 = vsel %vm1507, %v1502, %v1505
    %v1509 = vld [vmem:[#allocation2 + $0xd8] sm:$0xf]
    %v1510 = vld [vmem:[#allocation2 + $0xdc] sm:$0xf]
    %v1511 = vld [vmem:[#allocation2 + $0xe0] sm:$0xf]
    %v1512 = vld [vmem:[#allocation2 + $0xe4] sm:$0xf]
    %v1513 = vpack.c.bf16 %v1508, %v1508
    %v1518 = vunpack.c.l.b16 %v1509
    %v1519 = vunpack.c.l.b16 %v1510
    %v1520 = vunpack.c.l.b16 %v1511
    %v1521 = vunpack.c.l.b16 %v1512
    %v1522 = vpack.c.b16 %v1519, %v1518
    %v1523 = vpack.c.b16 %v1521, %v1520
    %1526 = vrot.lane.b32.xlu0 %v198, 64
    %v1527 = vpop.permute.xlu0 %1526
    %v1530 = vsel %vm167, %v1513, 0
    %1532 = vmatprep.subr.bf16.mxu0 0
    %1533 = vmatpush1.bf16.msra.mxu0 %v1522
    %1534 = vmatprep.subr.bf16.mxu0 0
    %1535 = vmatpush1.bf16.msra.mxu0 %v1523
    %1536 = vmatprep.subr.bf16.mxu0 0
    %1537 = vmatpush1.bf16.msra.mxu0 0
    %1538 = vmatprep.subr.bf16.mxu0 0
    %1539 = vmatpush1.bf16.msra.mxu0 0
    %1540 = vmatprep.subr.bf16.mxu0 0
    %1541 = vmatpush1.bf16.msra.mxu0 0
    %1542 = vmatprep.subr.bf16.mxu0 0
    %1543 = vmatpush1.bf16.msra.mxu0 0
    %1544 = vmatprep.subr.bf16.mxu0 0
    %1545 = vmatpush1.bf16.msra.mxu0 0
    %1546 = vmatprep.subr.bf16.mxu0 0
    %1547 = vmatpush1.bf16.msra.mxu0 0
    %1548 = vmatprep.subr.bf16.mxu0 0
    %1549 = vmatpush1.bf16.msra.mxu0 0
    %1550 = vmatprep.subr.bf16.mxu0 0
    %1551 = vmatpush1.bf16.msra.mxu0 0
    %1552 = vmatprep.subr.bf16.mxu0 0
    %1553 = vmatpush1.bf16.msra.mxu0 0
    %1554 = vmatprep.subr.bf16.mxu0 0
    %1555 = vmatpush1.bf16.msra.mxu0 0
    %1556 = vmatprep.subr.bf16.mxu0 0
    %1557 = vmatpush1.bf16.msra.mxu0 0
    %1558 = vmatprep.subr.bf16.mxu0 0
    %1559 = vmatpush1.bf16.msra.mxu0 0
    %1560 = vmatprep.subr.bf16.mxu0 0
    %1561 = vmatpush1.bf16.msra.mxu0 0
    %1562 = vmatprep.subr.bf16.mxu0 0
    %1563 = vmatpush1.bf16.msra.mxu0 0
    %1564 = vmatprep.mubr.bf16.mxu0 0
    %1565 = vmatmul.mubr.bf16.gmra.mrb[0].mxu0 %v1530
    %v1566 = vpop.f32.mrb[0].mxu0
    %v1567 = vadd.f32 %v1527, %v1566
    %v1568 = vpop.f32.mrb[0].mxu0
    %v1569 = vpop.f32.mrb[0].mxu0
    %v1570 = vpop.f32.mrb[0].mxu0
    %1571 = vdwg.mxu0
    %v1572 = vtanh.pop %v1567
    %v1573 = vld [vmem:[#allocation4 + $0x11] sm:$0x1]
    %1574 = vrot.lane.b32.xlu0 %v198, 32
    %v1575 = vpop.permute.xlu0 %1574
    %v1577 = vmul.f32 %v1572, %v1575
    %vm1578 = vcmask 254976
    %v1579 = vsel %vm1578, %v1577, 0.0
    %1580 = vadd.xlane.f32.xlu0 %v1579
    %v1581 = vpop.xlane.xlu0 %1580
    %v1582 = vlaneseq
    %v1583 = vshrl.u32 %v1582, 7
    %v1584 = vsub.s32 0, %v1583
    %v1585 = vrot.slane %v1573, %v1584
    %v1586 = vadd.f32 %v1581, %v1585
    %vm1587 = vcmask 1024
    %1588 = vst.msk [vmem:[%s4] sm:$0x3] %vm1587, %v1586
    // Predicated region
    $region26: #{anime_rating_forward.1} parent=1 // pred_check
      _
    $region27: #{anime_rating_forward.1} parent=1 // pred_check_branch
      %1590 = sbr.rel (0) target = $region29
    $region28: #{anime_rating_forward.1} parent=1 // pred_region
      _
    $region29: #{anime_rating_forward.1} parent=1 // pred_fallthru
      _
    // Predicated region
    $region30: #{anime_rating_forward.1} parent=1 // pred_check
      _
    $region31: #{anime_rating_forward.1} parent=1 // pred_check_branch
      %1592 = sbr.rel (0) target = $region33
    $region32: #{anime_rating_forward.1} parent=1 // pred_region
      _
    $region33: #{anime_rating_forward.1} parent=1 // pred_fallthru
      _
    %1593 = vsyncpa [#allocation3], 1
    %1594 = vsyncpa [#allocation5], 1

</llo_original>
